<compile_context>
chip_gen: v6e
topology: v6e:2x2x1
jax: 0.10.0
libtpu: 0.0.40
codegen_flags: <defaults>
</compile_context>

<pallas_src>
import jax
import jax.numpy as jnp
from jax import lax
from jax.experimental import pallas as pl
from jax.experimental.pallas import tpu as pltpu


def _upsample_conv_kernel(xt_ref, xtop_ref, xbot_ref, w_ref, b_ref, o_ref):
    # xt_ref  : (1, Ht, W, C)  bf16 -- input rows [t*Ht, (t+1)*Ht)
    # xtop_ref: (1, 1,  W, C)  bf16 -- input row  t*Ht - 1   (clamped to 0)
    # xbot_ref: (1, 1,  W, C)  bf16 -- input row  (t+1)*Ht   (clamped to H-1)
    # w_ref   : (3C, 3C)       bf16 -- w[kw*C+ci, kh*C+co] = W[kh, kw, ci, co]
    # b_ref   : (1, C)         f32
    # o_ref   : (1, 2, 2*Ht*W, C); o_ref[0, p, r*W + j, :] = output row 2*t*Ht + r,
    #                              output column 2*j + p.
    Ht, W, C = xt_ref.shape[1], xt_ref.shape[2], xt_ref.shape[3]
    R = 2 * Ht                       # output rows produced by this tile
    RW = R * W

    t = pl.program_id(1)
    last_t = pl.num_programs(1) - 1

    x = xt_ref[0].astype(jnp.float32)        # (Ht, W, C)
    prev = xtop_ref[0].astype(jnp.float32)   # (1, W, C)
    nxt = xbot_ref[0].astype(jnp.float32)    # (1, W, C)

    # ---- bilinear x2 along rows (align_corners=False) with the 1-row halo -----
    x_up = jnp.concatenate([prev, x], axis=0)[:Ht]     # x[i-1]  (clamped at row 0)
    x_dn = jnp.concatenate([x, nxt], axis=0)[1:]       # x[i+1]  (clamped at row H-1)
    even_r = 0.75 * x + 0.25 * x_up                    # UP row 2i
    odd_r = 0.75 * x + 0.25 * x_dn                     # UP row 2i+1
    up_tile = jnp.concatenate([even_r[:, None], odd_r[:, None]], axis=1).reshape(R, W, C)

    # conv row-halo: the UP rows just outside this tile (zero at the image border)
    top = 0.75 * prev + 0.25 * x[:1]                   # UP[2*t*Ht - 1]
    bot = 0.75 * nxt + 0.25 * x[-1:]                   # UP[2*(t+1)*Ht]
    top = top * jnp.where(t == 0, 0.0, 1.0)
    bot = bot * jnp.where(t == last_t, 0.0, 1.0)
    V = jnp.concatenate([top, up_tile, bot], axis=0)   # (R+2, W, C)

    # ---- bilinear x2 along columns, kept as even/odd column-parity planes -----
    V_l = jnp.concatenate([V[:, :1], V[:, :-1]], axis=1)    # V[:, j-1] (clamped)
    V_r = jnp.concatenate([V[:, 1:], V[:, -1:]], axis=1)    # V[:, j+1] (clamped)
    E = 0.75 * V + 0.25 * V_l                               # UP[:, 2j]
    Od = 0.75 * V + 0.25 * V_r                              # UP[:, 2j+1]
    # conv column neighbours (zero outside the upsampled image)
    OdR = jnp.concatenate([jnp.zeros_like(Od[:, :1]), Od[:, :-1]], axis=1)  # UP[:, 2j-1]
    EL = jnp.concatenate([E[:, 1:], jnp.zeros_like(E[:, -1:])], axis=1)     # UP[:, 2j+2]

    # ---- 3x3 conv: one bf16 MXU matmul per parity (all 9 taps folded) ---------
    A_e = jnp.concatenate([OdR, E, Od], axis=-1).astype(jnp.bfloat16)   # (R+2, W, 3C)
    A_o = jnp.concatenate([E, Od, EL], axis=-1).astype(jnp.bfloat16)
    w = w_ref[...]
    Pe = jnp.dot(A_e.reshape((R + 2) * W, 3 * C), w,
                 preferred_element_type=jnp.float32)                    # ((R+2)W, 3C)
    Po = jnp.dot(A_o.reshape((R + 2) * W, 3 * C), w,
                 preferred_element_type=jnp.float32)

    # y[r] = sum_kh P[r + kh][kh-th C-wide column block]  (3 shifted row slices)
    b = b_ref[...]
    y_e = (Pe[:RW, 0:C] + Pe[W:W + RW, C:2 * C]
           + Pe[2 * W:2 * W + RW, 2 * C:3 * C] + b)
    y_o = (Po[:RW, 0:C] + Po[W:W + RW, C:2 * C]
           + Po[2 * W:2 * W + RW, 2 * C:3 * C] + b)

    o_ref[0, 0] = y_e.astype(o_ref.dtype)   # even output columns
    o_ref[0, 1] = y_o.astype(o_ref.dtype)   # odd  output columns


def _pick_tile_rows(H, W, C, budget_elems=16 * 1024):
    """Largest divisor of H whose per-step working set (~44 B per upsampled element
    of f32/bf16 intermediates, i.e. ~1.5 MiB at the budget) stays well inside the
    default scoped-VMEM limits on every generation (16 MiB v5e, 32 MiB v6e/v7x
    scoped; 64 MiB physical on v7x)."""
    divs = [d for d in range(2, H + 1) if H % d == 0]
    fit = [d for d in divs if d * W * C <= budget_elems]
    if fit:
        return max(fit)
    return min(divs) if divs else H


def upsample_forward_nhwc(x_nhwc, weight_oihw, bias, *, ht=None, out_dtype=jnp.bfloat16):
    """Fused bilinear-x2 + 3x3 conv.  NHWC in -> NHWC out (spatial doubled), bf16."""
    N, H, W, C = x_nhwc.shape
    assert weight_oihw.shape == (C, C, 3, 3)
    assert W % 8 == 0, "W must be a multiple of 8 (sublane alignment of the blocks)"
    if ht is None:
        ht = _pick_tile_rows(H, W, C)
    assert H % ht == 0
    n_t = H // ht
    H2, W2 = 2 * H, 2 * W

    x_bf16 = x_nhwc.astype(jnp.bfloat16)
    # (O, I, 3, 3) -> (kh, kw, I, O) -> w_big[kw*C+ci, kh*C+co] = W[kh, kw, ci, co]
    w = jnp.transpose(weight_oihw, (2, 3, 1, 0))
    w_big = jnp.transpose(w.reshape(3, 3 * C, C), (1, 0, 2)).reshape(3 * C, 3 * C)
    w_big = w_big.astype(jnp.bfloat16)
    b = bias.reshape(1, C).astype(jnp.float32)

    out = pl.pallas_call(
        _upsample_conv_kernel,
        out_shape=jax.ShapeDtypeStruct((N, 2, H2 * W, C), out_dtype),
        grid_spec=pltpu.PrefetchScalarGridSpec(
            num_scalar_prefetch=0,
            grid=(N, n_t),
            in_specs=[
                # tile rows
                pl.BlockSpec((1, ht, W, C), lambda n, t: (n, t, 0, 0)),
                # 1-row halos (same array, clamped row index)
                pl.BlockSpec((1, 1, W, C),
                             lambda n, t: (n, jnp.maximum(t * ht - 1, 0), 0, 0)),
                pl.BlockSpec((1, 1, W, C),
                             lambda n, t: (n, jnp.minimum((t + 1) * ht, H - 1), 0, 0)),
                # folded conv weights + bias (grid-invariant, bf16/f32, small)
                pl.BlockSpec((3 * C, 3 * C), lambda n, t: (0, 0)),
                pl.BlockSpec((1, C), lambda n, t: (0, 0)),
            ],
            out_specs=pl.BlockSpec((1, 2, 2 * ht * W, C), lambda n, t: (n, 0, t, 0)),
        ),
        compiler_params=pltpu.CompilerParams(
            dimension_semantics=("parallel", "parallel")),
    )(x_bf16, x_bf16, x_bf16, w_big, b)

    # Column-parity interleave: one fused XLA copy over the bf16 output.
    y = out.reshape(N, 2, H2, W, C)
    y = jnp.transpose(y, (0, 2, 3, 1, 4)).reshape(N, H2, W2, C)
    return y


def upsample_forward(x_nchw, weight_oihw, bias, *, ht=None, out_dtype=jnp.bfloat16):
    """UpSample.forward: NCHW in -> NCHW out, spatial doubled (bf16 I/O)."""
    y = upsample_forward_nhwc(jnp.transpose(x_nchw, (0, 2, 3, 1)),
                              weight_oihw, bias, ht=ht, out_dtype=out_dtype)
    return jnp.transpose(y, (0, 3, 1, 2))


def _reference_forward(x, weight, bias):
    """Pure-JAX f32 reference: bilinear x2 (align_corners=False) then 3x3 conv pad=1."""
    N, C, H, W = x.shape

    def idx(in_size):
        d = jnp.arange(2 * in_size, dtype=jnp.float32)
        src = jnp.maximum((d + 0.5) / 2.0 - 0.5, 0.0)
        i0 = jnp.floor(src).astype(jnp.int32)
        i1 = jnp.minimum(i0 + 1, in_size - 1)
        f = src - i0.astype(jnp.float32)
        return i0, i1, f

    r0, r1, fr = idx(H)
    c0, c1, fc = idx(W)
    xr = (x[:, :, r0, :] * (1.0 - fr)[None, None, :, None]
          + x[:, :, r1, :] * fr[None, None, :, None])
    up = xr[:, :, :, c0] * (1.0 - fc) + xr[:, :, :, c1] * fc
    y = lax.conv_general_dilated(
        up, weight, window_strides=(1, 1), padding=((1, 1), (1, 1)),
        dimension_numbers=("NCHW", "OIHW", "NCHW"),
        precision=lax.Precision.HIGHEST)
    return y + bias[None, :, None, None]


if __name__ == "__main__":
    N, C, H, W = 2, 4, 16, 16
    key = jax.random.PRNGKey(0)
    kx, kw, kb = jax.random.split(key, 3)

    x = jax.random.normal(kx, (N, C, H, W), dtype=jnp.float32)
    fan_in = C * 3 * 3
    bound = 1.0 / (fan_in ** 0.5)
    weight = jax.random.uniform(kw, (C, C, 3, 3), minval=-bound, maxval=bound,
                                dtype=jnp.float32)
    bias = jax.random.uniform(kb, (C,), minval=-bound, maxval=bound, dtype=jnp.float32)

    # ht=4 -> 4 H-tiles per image: exercises the halo / multi-tile path.
    y = jax.block_until_ready(upsample_forward(x, weight, bias, ht=4))
    assert y.shape == (N, C, 2 * H, 2 * W)

    y_ref = _reference_forward(x, weight, bias)
    err = float(jnp.max(jnp.abs(y.astype(jnp.float32) - y_ref)))
    assert err < 5e-2, f"max abs error too large: {err}"

    print("KERNEL_OK")
</pallas_src>

<mosaic_0001>
module attributes {stable_mosaic.version = 11 : i64} {
  func.func @_upsample_conv_kernel(%arg0: i32, %arg1: i32, %arg2: memref<1x4x16x4xbf16, #tpu.memory_space<vmem>>, %arg3: memref<1x1x16x4xbf16, #tpu.memory_space<vmem>>, %arg4: memref<1x1x16x4xbf16, #tpu.memory_space<vmem>>, %arg5: memref<12x12xbf16, #tpu.memory_space<vmem>>, %arg6: memref<1x4xf32, #tpu.memory_space<vmem>>, %arg7: memref<1x2x128x4xbf16, #tpu.memory_space<vmem>>) attributes {dimension_semantics = [#tpu.dimension_semantics<parallel>, #tpu.dimension_semantics<parallel>], iteration_bounds = array<i64: 2, 4>, scalar_prefetch = 0 : i64, scratch_operands = 0 : i64, tpu.core_type = #tpu.core_type<tc>, window_params = [{transform_indices = @transform_0, window_bounds = array<i64: 1, 4, 16, 4>}, {transform_indices = @transform_1, window_bounds = array<i64: 1, 1, 16, 4>}, {transform_indices = @transform_2, window_bounds = array<i64: 1, 1, 16, 4>}, {pipeline_mode = #tpu.pipeline_mode<synchronous>, transform_indices = @transform_3, window_bounds = array<i64: 12, 12>}, {pipeline_mode = #tpu.pipeline_mode<synchronous>, transform_indices = @transform_4, window_bounds = array<i64: 1, 4>}, {transform_indices = @transform_5, window_bounds = array<i64: 1, 2, 128, 4>}]} {
    %c0 = arith.constant 0 : index
    %c0_0 = arith.constant 0 : index
    %c0_1 = arith.constant 0 : index
    %c0_2 = arith.constant 0 : index
    %0 = vector.load %arg2[%c0, %c0_0, %c0_1, %c0_2] : memref<1x4x16x4xbf16, #tpu.memory_space<vmem>>, vector<1x4x16x4xbf16>
    %1 = vector.shape_cast %0 : vector<1x4x16x4xbf16> to vector<4x16x4xbf16>
    %2 = arith.extf %1 : vector<4x16x4xbf16> to vector<4x16x4xf32>
    %c0_3 = arith.constant 0 : index
    %c0_4 = arith.constant 0 : index
    %c0_5 = arith.constant 0 : index
    %c0_6 = arith.constant 0 : index
    %3 = vector.load %arg3[%c0_3, %c0_4, %c0_5, %c0_6] : memref<1x1x16x4xbf16, #tpu.memory_space<vmem>>, vector<1x1x16x4xbf16>
    %4 = vector.shape_cast %3 : vector<1x1x16x4xbf16> to vector<1x16x4xbf16>
    %5 = arith.extf %4 : vector<1x16x4xbf16> to vector<1x16x4xf32>
    %c0_7 = arith.constant 0 : index
    %c0_8 = arith.constant 0 : index
    %c0_9 = arith.constant 0 : index
    %c0_10 = arith.constant 0 : index
    %6 = vector.load %arg4[%c0_7, %c0_8, %c0_9, %c0_10] : memref<1x1x16x4xbf16, #tpu.memory_space<vmem>>, vector<1x1x16x4xbf16>
    %7 = vector.shape_cast %6 : vector<1x1x16x4xbf16> to vector<1x16x4xbf16>
    %8 = arith.extf %7 : vector<1x16x4xbf16> to vector<1x16x4xf32>
    %9 = tpu.concatenate %5, %2 in 0 : vector<1x16x4xf32>, vector<4x16x4xf32> -> vector<5x16x4xf32>
    %10 = vector.extract_strided_slice %9 {offsets = [0, 0, 0], sizes = [4, 16, 4], strides = [1, 1, 1]} : vector<5x16x4xf32> to vector<4x16x4xf32>
    %11 = tpu.concatenate %2, %8 in 0 : vector<4x16x4xf32>, vector<1x16x4xf32> -> vector<5x16x4xf32>
    %12 = vector.extract_strided_slice %11 {offsets = [1, 0, 0], sizes = [4, 16, 4], strides = [1, 1, 1]} : vector<5x16x4xf32> to vector<4x16x4xf32>
    %cst = arith.constant 7.500000e-01 : f32
    %13 = vector.broadcast %cst : f32 to vector<4x16x4xf32>
    %14 = arith.mulf %13, %2 : vector<4x16x4xf32>
    %cst_11 = arith.constant 2.500000e-01 : f32
    %15 = vector.broadcast %cst_11 : f32 to vector<4x16x4xf32>
    %16 = arith.mulf %15, %10 : vector<4x16x4xf32>
    %17 = arith.addf %14, %16 : vector<4x16x4xf32>
    %cst_12 = arith.constant 7.500000e-01 : f32
    %18 = vector.broadcast %cst_12 : f32 to vector<4x16x4xf32>
    %19 = arith.mulf %18, %2 : vector<4x16x4xf32>
    %cst_13 = arith.constant 2.500000e-01 : f32
    %20 = vector.broadcast %cst_13 : f32 to vector<4x16x4xf32>
    %21 = arith.mulf %20, %12 : vector<4x16x4xf32>
    %22 = arith.addf %19, %21 : vector<4x16x4xf32>
    %23 = vector.shape_cast %17 : vector<4x16x4xf32> to vector<4x1x16x4xf32>
    %24 = vector.shape_cast %22 : vector<4x16x4xf32> to vector<4x1x16x4xf32>
    %25 = tpu.concatenate %23, %24 in 1 : vector<4x1x16x4xf32>, vector<4x1x16x4xf32> -> vector<4x2x16x4xf32>
    %26 = vector.shape_cast %25 : vector<4x2x16x4xf32> to vector<8x16x4xf32>
    %cst_14 = arith.constant 7.500000e-01 : f32
    %27 = vector.broadcast %cst_14 : f32 to vector<1x16x4xf32>
    %28 = arith.mulf %27, %5 : vector<1x16x4xf32>
    %29 = vector.extract_strided_slice %2 {offsets = [0, 0, 0], sizes = [1, 16, 4], strides = [1, 1, 1]} : vector<4x16x4xf32> to vector<1x16x4xf32>
    %cst_15 = arith.constant 2.500000e-01 : f32
    %30 = vector.broadcast %cst_15 : f32 to vector<1x16x4xf32>
    %31 = arith.mulf %30, %29 : vector<1x16x4xf32>
    %32 = arith.addf %28, %31 : vector<1x16x4xf32>
    %cst_16 = arith.constant 7.500000e-01 : f32
    %33 = vector.broadcast %cst_16 : f32 to vector<1x16x4xf32>
    %34 = arith.mulf %33, %8 : vector<1x16x4xf32>
    %35 = vector.extract_strided_slice %2 {offsets = [3, 0, 0], sizes = [1, 16, 4], strides = [1, 1, 1]} : vector<4x16x4xf32> to vector<1x16x4xf32>
    %cst_17 = arith.constant 2.500000e-01 : f32
    %36 = vector.broadcast %cst_17 : f32 to vector<1x16x4xf32>
    %37 = arith.mulf %36, %35 : vector<1x16x4xf32>
    %38 = arith.addf %34, %37 : vector<1x16x4xf32>
    %c0_i32 = arith.constant 0 : i32
    %39 = arith.cmpi eq, %arg1, %c0_i32 : i32
    %cst_18 = arith.constant 0.000000e+00 : f32
    %cst_19 = arith.constant 1.000000e+00 : f32
    %40 = arith.select %39, %cst_18, %cst_19 : f32
    %41 = vector.broadcast %40 : f32 to vector<1x16x4xf32>
    %42 = arith.mulf %32, %41 : vector<1x16x4xf32>
    %c3_i32 = arith.constant 3 : i32
    %43 = arith.cmpi eq, %arg1, %c3_i32 : i32
    %cst_20 = arith.constant 0.000000e+00 : f32
    %cst_21 = arith.constant 1.000000e+00 : f32
    %44 = arith.select %43, %cst_20, %cst_21 : f32
    %45 = vector.broadcast %44 : f32 to vector<1x16x4xf32>
    %46 = arith.mulf %38, %45 : vector<1x16x4xf32>
    %47 = tpu.concatenate %42, %26, %46 in 0 : vector<1x16x4xf32>, vector<8x16x4xf32>, vector<1x16x4xf32> -> vector<10x16x4xf32>
    %48 = vector.extract_strided_slice %47 {offsets = [0, 0, 0], sizes = [10, 1, 4], strides = [1, 1, 1]} : vector<10x16x4xf32> to vector<10x1x4xf32>
    %49 = vector.extract_strided_slice %47 {offsets = [0, 0, 0], sizes = [10, 15, 4], strides = [1, 1, 1]} : vector<10x16x4xf32> to vector<10x15x4xf32>
    %50 = tpu.concatenate %48, %49 in 1 : vector<10x1x4xf32>, vector<10x15x4xf32> -> vector<10x16x4xf32>
    %51 = vector.extract_strided_slice %47 {offsets = [0, 1, 0], sizes = [10, 15, 4], strides = [1, 1, 1]} : vector<10x16x4xf32> to vector<10x15x4xf32>
    %52 = vector.extract_strided_slice %47 {offsets = [0, 15, 0], sizes = [10, 1, 4], strides = [1, 1, 1]} : vector<10x16x4xf32> to vector<10x1x4xf32>
    %53 = tpu.concatenate %51, %52 in 1 : vector<10x15x4xf32>, vector<10x1x4xf32> -> vector<10x16x4xf32>
    %cst_22 = arith.constant 7.500000e-01 : f32
    %54 = vector.broadcast %cst_22 : f32 to vector<10x16x4xf32>
    %55 = arith.mulf %54, %47 : vector<10x16x4xf32>
    %cst_23 = arith.constant 2.500000e-01 : f32
    %56 = vector.broadcast %cst_23 : f32 to vector<10x16x4xf32>
    %57 = arith.mulf %56, %50 : vector<10x16x4xf32>
    %58 = arith.addf %55, %57 : vector<10x16x4xf32>
    %cst_24 = arith.constant 7.500000e-01 : f32
    %59 = vector.broadcast %cst_24 : f32 to vector<10x16x4xf32>
    %60 = arith.mulf %59, %47 : vector<10x16x4xf32>
    %cst_25 = arith.constant 2.500000e-01 : f32
    %61 = vector.broadcast %cst_25 : f32 to vector<10x16x4xf32>
    %62 = arith.mulf %61, %53 : vector<10x16x4xf32>
    %63 = arith.addf %60, %62 : vector<10x16x4xf32>
    %cst_26 = arith.constant 0.000000e+00 : f32
    %64 = vector.broadcast %cst_26 : f32 to vector<10x1x4xf32>
    %65 = vector.extract_strided_slice %63 {offsets = [0, 0, 0], sizes = [10, 15, 4], strides = [1, 1, 1]} : vector<10x16x4xf32> to vector<10x15x4xf32>
    %66 = tpu.concatenate %64, %65 in 1 : vector<10x1x4xf32>, vector<10x15x4xf32> -> vector<10x16x4xf32>
    %67 = vector.extract_strided_slice %58 {offsets = [0, 1, 0], sizes = [10, 15, 4], strides = [1, 1, 1]} : vector<10x16x4xf32> to vector<10x15x4xf32>
    %cst_27 = arith.constant 0.000000e+00 : f32
    %68 = vector.broadcast %cst_27 : f32 to vector<10x1x4xf32>
    %69 = tpu.concatenate %67, %68 in 1 : vector<10x15x4xf32>, vector<10x1x4xf32> -> vector<10x16x4xf32>
    %70 = tpu.concatenate %66, %58, %63 in 2 : vector<10x16x4xf32>, vector<10x16x4xf32>, vector<10x16x4xf32> -> vector<10x16x12xf32>
    %71 = arith.truncf %70 : vector<10x16x12xf32> to vector<10x16x12xbf16>
    %72 = tpu.concatenate %58, %63, %69 in 2 : vector<10x16x4xf32>, vector<10x16x4xf32>, vector<10x16x4xf32> -> vector<10x16x12xf32>
    %73 = arith.truncf %72 : vector<10x16x12xf32> to vector<10x16x12xbf16>
    %c0_28 = arith.constant 0 : index
    %c0_29 = arith.constant 0 : index
    %74 = vector.load %arg5[%c0_28, %c0_29] : memref<12x12xbf16, #tpu.memory_space<vmem>>, vector<12x12xbf16>
    %75 = vector.shape_cast %71 : vector<10x16x12xbf16> to vector<160x12xbf16>
    %cst_30 = arith.constant dense<0.000000e+00> : vector<160x12xf32>
    %76 = tpu.matmul %75, %74, %cst_30 {dimension_numbers = #tpu.dot_dimension_numbers<[1], [0], [0], [1], [0, 0, 1, 1], [], []>} : vector<160x12xbf16>, vector<12x12xbf16>, vector<160x12xf32> -> vector<160x12xf32>
    %77 = vector.shape_cast %73 : vector<10x16x12xbf16> to vector<160x12xbf16>
    %cst_31 = arith.constant dense<0.000000e+00> : vector<160x12xf32>
    %78 = tpu.matmul %77, %74, %cst_31 {dimension_numbers = #tpu.dot_dimension_numbers<[1], [0], [0], [1], [0, 0, 1, 1], [], []>} : vector<160x12xbf16>, vector<12x12xbf16>, vector<160x12xf32> -> vector<160x12xf32>
    %c0_32 = arith.constant 0 : index
    %c0_33 = arith.constant 0 : index
    %79 = vector.load %arg6[%c0_32, %c0_33] : memref<1x4xf32, #tpu.memory_space<vmem>>, vector<1x4xf32>
    %80 = vector.extract_strided_slice %76 {offsets = [0, 0], sizes = [128, 4], strides = [1, 1]} : vector<160x12xf32> to vector<128x4xf32>
    %81 = vector.extract_strided_slice %76 {offsets = [16, 4], sizes = [128, 4], strides = [1, 1]} : vector<160x12xf32> to vector<128x4xf32>
    %82 = arith.addf %80, %81 : vector<128x4xf32>
    %83 = vector.extract_strided_slice %76 {offsets = [32, 8], sizes = [128, 4], strides = [1, 1]} : vector<160x12xf32> to vector<128x4xf32>
    %84 = arith.addf %82, %83 : vector<128x4xf32>
    %85 = vector.broadcast %79 : vector<1x4xf32> to vector<128x4xf32>
    %86 = arith.addf %84, %85 : vector<128x4xf32>
    %87 = vector.extract_strided_slice %78 {offsets = [0, 0], sizes = [128, 4], strides = [1, 1]} : vector<160x12xf32> to vector<128x4xf32>
    %88 = vector.extract_strided_slice %78 {offsets = [16, 4], sizes = [128, 4], strides = [1, 1]} : vector<160x12xf32> to vector<128x4xf32>
    %89 = arith.addf %87, %88 : vector<128x4xf32>
    %90 = vector.extract_strided_slice %78 {offsets = [32, 8], sizes = [128, 4], strides = [1, 1]} : vector<160x12xf32> to vector<128x4xf32>
    %91 = arith.addf %89, %90 : vector<128x4xf32>
    %92 = vector.broadcast %79 : vector<1x4xf32> to vector<128x4xf32>
    %93 = arith.addf %91, %92 : vector<128x4xf32>
    %94 = arith.truncf %86 : vector<128x4xf32> to vector<128x4xbf16>
    %c0_34 = arith.constant 0 : index
    %c0_35 = arith.constant 0 : index
    %c0_36 = arith.constant 0 : index
    %c0_37 = arith.constant 0 : index
    %95 = vector.load %arg7[%c0_34, %c0_35, %c0_36, %c0_37] : memref<1x2x128x4xbf16, #tpu.memory_space<vmem>>, vector<1x1x128x4xbf16>
    %96 = vector.shape_cast %95 : vector<1x1x128x4xbf16> to vector<128x4xbf16>
    %97 = vector.shape_cast %94 : vector<128x4xbf16> to vector<1x1x128x4xbf16>
    tpu.vector_store %arg7[%c0_34, %c0_35, %c0_36, %c0_37], %97 {strides = array<i32>} : memref<1x2x128x4xbf16, #tpu.memory_space<vmem>>, vector<1x1x128x4xbf16>,
    %98 = arith.truncf %93 : vector<128x4xf32> to vector<128x4xbf16>
    %c0_38 = arith.constant 0 : index
    %c1 = arith.constant 1 : index
    %c0_39 = arith.constant 0 : index
    %c0_40 = arith.constant 0 : index
    %99 = vector.load %arg7[%c0_38, %c1, %c0_39, %c0_40] : memref<1x2x128x4xbf16, #tpu.memory_space<vmem>>, vector<1x1x128x4xbf16>
    %100 = vector.shape_cast %99 : vector<1x1x128x4xbf16> to vector<128x4xbf16>
    %101 = vector.shape_cast %98 : vector<128x4xbf16> to vector<1x1x128x4xbf16>
    tpu.vector_store %arg7[%c0_38, %c1, %c0_39, %c0_40], %101 {strides = array<i32>} : memref<1x2x128x4xbf16, #tpu.memory_space<vmem>>, vector<1x1x128x4xbf16>,
    return
  }
  func.func @transform_0(%arg0: i32, %arg1: i32) -> (i32, i32, i32, i32) {
    %c0_i32 = arith.constant 0 : i32
    %c0_i32_0 = arith.constant 0 : i32
    %c0_i32_1 = arith.constant 0 : i32
    return %arg0, %arg1, %c0_i32, %c0_i32_0 : i32, i32, i32, i32
  }
  func.func @transform_1(%arg0: i32, %arg1: i32) -> (i32, i32, i32, i32) {
    %c4_i32 = arith.constant 4 : i32
    %0 = arith.muli %arg1, %c4_i32 : i32
    %c1_i32 = arith.constant 1 : i32
    %1 = arith.subi %0, %c1_i32 : i32
    %c0_i32 = arith.constant 0 : i32
    %2 = arith.maxsi %1, %c0_i32 : i32
    %c0_i32_0 = arith.constant 0 : i32
    %c0_i32_1 = arith.constant 0 : i32
    %c0_i32_2 = arith.constant 0 : i32
    return %arg0, %2, %c0_i32_0, %c0_i32_1 : i32, i32, i32, i32
  }
  func.func @transform_2(%arg0: i32, %arg1: i32) -> (i32, i32, i32, i32) {
    %c1_i32 = arith.constant 1 : i32
    %0 = arith.addi %arg1, %c1_i32 : i32
    %c4_i32 = arith.constant 4 : i32
    %1 = arith.muli %0, %c4_i32 : i32
    %c15_i32 = arith.constant 15 : i32
    %2 = arith.minsi %1, %c15_i32 : i32
    %c0_i32 = arith.constant 0 : i32
    %c0_i32_0 = arith.constant 0 : i32
    %c0_i32_1 = arith.constant 0 : i32
    return %arg0, %2, %c0_i32, %c0_i32_0 : i32, i32, i32, i32
  }
  func.func @transform_3(%arg0: i32, %arg1: i32) -> (i32, i32) {
    %c0_i32 = arith.constant 0 : i32
    %c0_i32_0 = arith.constant 0 : i32
    %c0_i32_1 = arith.constant 0 : i32
    return %c0_i32, %c0_i32_0 : i32, i32
  }
  func.func @transform_4(%arg0: i32, %arg1: i32) -> (i32, i32) {
    %c0_i32 = arith.constant 0 : i32
    %c0_i32_0 = arith.constant 0 : i32
    %c0_i32_1 = arith.constant 0 : i32
    return %c0_i32, %c0_i32_0 : i32, i32
  }
  func.func @transform_5(%arg0: i32, %arg1: i32) -> (i32, i32, i32, i32) {
    %c0_i32 = arith.constant 0 : i32
    %c0_i32_0 = arith.constant 0 : i32
    %c0_i32_1 = arith.constant 0 : i32
    return %arg0, %c0_i32, %arg1, %c0_i32_0 : i32, i32, i32, i32
  }
}

</mosaic_0001>

<llo_original>
// kernel: tpu_custom_call.1
$region0: #{tpu_custom_call.1}
  #allocation0 [shape = 'u32[]', space=smem, size = 0x4, offset = 0x4, fixed_abs, tag = 'smem constant byte address 0x4 - core index']
  #allocation1 [shape = 'u32[144,128]{1,0:T(1,128)}', space=vmem, size = 0x12000, scoped, tag = 'internal scratch']
  %s0 = inlined_call_operand.vmem [shape: bf16[2,16,16,4], index: 0, kind: input, shape index: {}]
  %s1 = inlined_call_operand.vmem [shape: bf16[2,16,16,4], index: 1, kind: input, shape index: {}]
  %s2 = inlined_call_operand.vmem [shape: bf16[2,16,16,4], index: 2, kind: input, shape index: {}]
  %s3 = inlined_call_operand.vmem [shape: bf16[12,12], index: 3, kind: input, shape index: {}]
  %s4 = inlined_call_operand.vmem [shape: f32[1,4], index: 4, kind: input, shape index: {}]
  %s5 = inlined_call_operand.vmem [shape: bf16[2,2,512,4], index: 5, kind: output, shape index: {}]
  %s6 = sld [smem:[#allocation0]]
  $region90: #{tpu_custom_call.1} parent=0
    _
  %s8 = ssub.s32 1, %s6
  %s9 = scalar_select 0, %s8, %s6
  $region1: #{tpu_custom_call.1} parent=0
    #allocation2 [shape = 'u8[131072]{0}', space=vmem, size = 0x20000, scoped, tag = 'output window, operand 0']
    loop: start=0, step=1, limit=10
    $region2: #{tpu_custom_call.1} parent=1 // loop_pre_header
      _
    $region3: #{tpu_custom_call.1} parent=1 // loop_header
      %s11 = sphi 0, %s15
      %p12 = scmp.ge.s32.totalorder %s11, 10
      %s18 = sphi 0, %s30
      %s19 = sphi 0, %s26
      %s20 = sphi 0, %s18
      %s21 = sphi 0, %s19
      %s22 = sphi 0, %s20
      %s23 = sphi 0, %s21
      %s35 = sphi 0, %s37
      %s38 = sphi 0, %s35
      %s39 = sphi 0, %s38
      %s55 = sphi 0, %s39
      %s71 = sphi 0, %s73
      %s74 = sphi 0, %s71
      %s75 = sphi 0, %s74
      %s91 = sphi 0, %s75
      %s107 = sphi 0, %s109
      %s110 = sphi 0, %s107
      %s111 = sphi 0, %s110
      %s127 = sphi 0, %s111
      %s131 = sphi 0, %s131
      %s133 = sphi 0, %s131
      %s134 = sphi 0, %s133
      %s148 = sphi 0, %s134
      %s152 = sphi 0, %s152
      %s154 = sphi 0, %s152
      %s155 = sphi 0, %s154
      %s169 = sphi 0, %s155
      %s177 = sphi 0, %s179
      %s180 = sphi 0, %s177
      %s181 = sphi 0, %s180
      %s197 = sphi 0, %s181
    $region4: #{tpu_custom_call.1} parent=1 // loop_header_branch
      %14 = sbr.rel (%p12) target = $region8
    $region5: #{tpu_custom_call.1} parent=1 // loop_body
      %s16 = ssub.s32 %s11, 1
      %s17 = ssub.s32 %s11, 2
      %s24 = sadd.s32 1, %s19
      %p25 = scmp.ge.s32.totalorder %s24, 4
      %s26 = scalar_select %p25, 0, %s24
      %s27 = sadd.s32 1, %s18
      %s28 = scalar_select %p25, %s27, %s18
      %p29 = scmp.ge.s32.totalorder %s28, 2
      %s30 = scalar_select %p29, 0, %s28
      %s31 = ssub.s32 %s18, %s30
      %s32 = ssub.s32 %s19, %s26
      %s33 = sor.u32 %s31, %s32
      %p34 = scmp.eq.s32.totalorder %s33, 0
      %s36 = sadd.s32 %s35, 1
      %s37 = scalar_select %p34, %s35, %s36
      %p40 = pneg %p34
      %p41 = scmp.eq.s32.totalorder %s11, 7
      %p42 = por %p40, %p41
      %p43 = scmp.ne.s32.totalorder %s35, %s38
      %p44 = scmp.eq.s32.totalorder %s11, 0
      %p45 = por %p43, %p44
      %p46 = scmp.ne.s32.totalorder %s35, %s38
      %p47 = scmp.eq.s32.totalorder %s16, 7
      %p48 = por %p46, %p47
      %p49 = scmp.ne.s32.totalorder %s38, %s39
      %p50 = scmp.eq.s32.totalorder %s16, 0
      %p51 = por %p49, %p50
      %p52 = scmp.ne.s32.totalorder %s38, %s39
      %p53 = scmp.eq.s32.totalorder %s17, 7
      %p54 = por %p52, %p53
      %p56 = scmp.ne.s32.totalorder %s39, %s55
      %p57 = scmp.eq.s32.totalorder %s17, 0
      %p58 = por %p56, %p57
      %s59 = smul.u32 %s19, 4
      %s60 = ssub.s32 %s59, 1
      %p61 = scmp.gt.s32.totalorder %s60, 0
      %s62 = scalar_select %p61, %s60, 0
      %s63 = smul.u32 %s26, 4
      %s64 = ssub.s32 %s63, 1
      %p65 = scmp.gt.s32.totalorder %s64, 0
      %s66 = scalar_select %p65, %s64, 0
      %s67 = ssub.s32 %s18, %s30
      %s68 = ssub.s32 %s62, %s66
      %s69 = sor.u32 %s67, %s68
      %p70 = scmp.eq.s32.totalorder %s69, 0
      %s72 = sadd.s32 %s71, 1
      %s73 = scalar_select %p70, %s71, %s72
      %p76 = pneg %p70
      %p77 = scmp.eq.s32.totalorder %s11, 7
      %p78 = por %p76, %p77
      %p79 = scmp.ne.s32.totalorder %s71, %s74
      %p80 = scmp.eq.s32.totalorder %s11, 0
      %p81 = por %p79, %p80
      %p82 = scmp.ne.s32.totalorder %s71, %s74
      %p83 = scmp.eq.s32.totalorder %s16, 7
      %p84 = por %p82, %p83
      %p85 = scmp.ne.s32.totalorder %s74, %s75
      %p86 = scmp.eq.s32.totalorder %s16, 0
      %p87 = por %p85, %p86
      %p88 = scmp.ne.s32.totalorder %s74, %s75
      %p89 = scmp.eq.s32.totalorder %s17, 7
      %p90 = por %p88, %p89
      %p92 = scmp.ne.s32.totalorder %s75, %s91
      %p93 = scmp.eq.s32.totalorder %s17, 0
      %p94 = por %p92, %p93
      %s95 = sadd.s32 %s19, 1
      %s96 = smul.u32 %s95, 4
      %p97 = scmp.lt.s32.totalorder %s96, 15
      %s98 = scalar_select %p97, %s96, 15
      %s99 = sadd.s32 %s26, 1
      %s100 = smul.u32 %s99, 4
      %p101 = scmp.lt.s32.totalorder %s100, 15
      %s102 = scalar_select %p101, %s100, 15
      %s103 = ssub.s32 %s18, %s30
      %s104 = ssub.s32 %s98, %s102
      %s105 = sor.u32 %s103, %s104
      %p106 = scmp.eq.s32.totalorder %s105, 0
      %s108 = sadd.s32 %s107, 1
      %s109 = scalar_select %p106, %s107, %s108
      %p112 = pneg %p106
      %p113 = scmp.eq.s32.totalorder %s11, 7
      %p114 = por %p112, %p113
      %p115 = scmp.ne.s32.totalorder %s107, %s110
      %p116 = scmp.eq.s32.totalorder %s11, 0
      %p117 = por %p115, %p116
      %p118 = scmp.ne.s32.totalorder %s107, %s110
      %p119 = scmp.eq.s32.totalorder %s16, 7
      %p120 = por %p118, %p119
      %p121 = scmp.ne.s32.totalorder %s110, %s111
      %p122 = scmp.eq.s32.totalorder %s16, 0
      %p123 = por %p121, %p122
      %p124 = scmp.ne.s32.totalorder %s110, %s111
      %p125 = scmp.eq.s32.totalorder %s17, 7
      %p126 = por %p124, %p125
      %p128 = scmp.ne.s32.totalorder %s111, %s127
      %p129 = scmp.eq.s32.totalorder %s17, 0
      %p130 = por %p128, %p129
      %s132 = sadd.s32 %s131, 1
      %p135 = scmp.eq.s32.totalorder %s11, 7
      %p136 = scmp.ne.s32.totalorder %s131, %s133
      %p137 = scmp.eq.s32.totalorder %s11, 0
      %p138 = por %p136, %p137
      %p139 = scmp.ne.s32.totalorder %s131, %s133
      %p140 = scmp.eq.s32.totalorder %s16, 7
      %p141 = por %p139, %p140
      %p142 = scmp.ne.s32.totalorder %s133, %s134
      %p143 = scmp.eq.s32.totalorder %s16, 0
      %p144 = por %p142, %p143
      %p145 = scmp.ne.s32.totalorder %s133, %s134
      %p146 = scmp.eq.s32.totalorder %s17, 7
      %p147 = por %p145, %p146
      %p149 = scmp.ne.s32.totalorder %s134, %s148
      %p150 = scmp.eq.s32.totalorder %s17, 0
      %p151 = por %p149, %p150
      %s153 = sadd.s32 %s152, 1
      %p156 = scmp.eq.s32.totalorder %s11, 7
      %p157 = scmp.ne.s32.totalorder %s152, %s154
      %p158 = scmp.eq.s32.totalorder %s11, 0
      %p159 = por %p157, %p158
      %p160 = scmp.ne.s32.totalorder %s152, %s154
      %p161 = scmp.eq.s32.totalorder %s16, 7
      %p162 = por %p160, %p161
      %p163 = scmp.ne.s32.totalorder %s154, %s155
      %p164 = scmp.eq.s32.totalorder %s16, 0
      %p165 = por %p163, %p164
      %p166 = scmp.ne.s32.totalorder %s154, %s155
      %p167 = scmp.eq.s32.totalorder %s17, 7
      %p168 = por %p166, %p167
      %p170 = scmp.ne.s32.totalorder %s155, %s169
      %p171 = scmp.eq.s32.totalorder %s17, 0
      %p172 = por %p170, %p171
      %s173 = ssub.s32 %s18, %s30
      %s174 = ssub.s32 %s19, %s26
      %s175 = sor.u32 %s173, %s174
      %p176 = scmp.eq.s32.totalorder %s175, 0
      %s178 = sadd.s32 %s177, 1
      %s179 = scalar_select %p176, %s177, %s178
      %p182 = pneg %p176
      %p183 = scmp.eq.s32.totalorder %s11, 7
      %p184 = por %p182, %p183
      %p185 = scmp.ne.s32.totalorder %s177, %s180
      %p186 = scmp.eq.s32.totalorder %s11, 0
      %p187 = por %p185, %p186
      %p188 = scmp.ne.s32.totalorder %s177, %s180
      %p189 = scmp.eq.s32.totalorder %s16, 7
      %p190 = por %p188, %p189
      %p191 = scmp.ne.s32.totalorder %s180, %s181
      %p192 = scmp.eq.s32.totalorder %s16, 0
      %p193 = por %p191, %p192
      %p194 = scmp.ne.s32.totalorder %s180, %s181
      %p195 = scmp.eq.s32.totalorder %s17, 7
      %p196 = por %p194, %p195
      %p198 = scmp.ne.s32.totalorder %s181, %s197
      %p199 = scmp.eq.s32.totalorder %s17, 0
      %p200 = por %p198, %p199
      %p201 = scmp.le.s32.totalorder 1, %s11
      %p202 = scmp.lt.s32.totalorder %s11, 9
      %p203 = pnand %p201, %p202
      %p204 = pneg %p203
      // Predicated region
      $region9: #{tpu_custom_call.1} parent=5 // pred_check
        _
      $region10: #{tpu_custom_call.1} parent=5 // pred_check_branch
        %206 = sbr.rel (%p203) target = $region12
      $region11: #{tpu_custom_call.1} parent=5 // pred_region
        %s207 = ssub.s32 %s11, 1
        // Predicated region
        $region13: #{tpu_custom_call.1} parent=11 // pred_check
          %p208 = pneg %p144
        $region14: #{tpu_custom_call.1} parent=11 // pred_check_branch
          %210 = sbr.rel (%p208) target = $region16
        $region15: #{tpu_custom_call.1} parent=11 // pred_region
          _
        $region16: #{tpu_custom_call.1} parent=11 // pred_fallthru
          _
        // Predicated region
        $region17: #{tpu_custom_call.1} parent=11 // pred_check
          %p211 = pneg %p165
        $region18: #{tpu_custom_call.1} parent=11 // pred_check_branch
          %213 = sbr.rel (%p211) target = $region20
        $region19: #{tpu_custom_call.1} parent=11 // pred_region
          _
        $region20: #{tpu_custom_call.1} parent=11 // pred_fallthru
          _
      $region12: #{tpu_custom_call.1} parent=5 // pred_fallthru
        _
      %p214 = scmp.lt.s32.totalorder %s11, 8
      // Predicated region
      $region21: #{tpu_custom_call.1} parent=5 // pred_check
        %p215 = pneg %p214
      $region22: #{tpu_custom_call.1} parent=5 // pred_check_branch
        %217 = sbr.rel (%p215) target = $region24
      $region23: #{tpu_custom_call.1} parent=5 // pred_region
        // Predicated region
        $region25: #{tpu_custom_call.1} parent=23 // pred_check
          %p218 = pneg %p45
        $region26: #{tpu_custom_call.1} parent=23 // pred_check_branch
          %220 = sbr.rel (%p218) target = $region28
        $region27: #{tpu_custom_call.1} parent=23 // pred_region
          %s221 = smul.u32 4, %s19
          %p222 = scmp.lt.s32.totalorder %s18, 1
          %s223 = scalar_select %p222, %s18, 1
          %p224 = scmp.lt.s32.totalorder %s221, 15
          %s225 = scalar_select %p224, %s221, 15
          %s226 = smul.addr %s225, 2
          %s227 = smul.addr %s223, 32
          %s228 = sadd.s32 %s226, %s227
          %s229 = smul.addr %s228, 4
          %s230 = scalar_lea.vmem %s0, %s229
          %s231 = smul.u32 4, %s19
        $region28: #{tpu_custom_call.1} parent=23 // pred_fallthru
          _
        // Predicated region
        $region29: #{tpu_custom_call.1} parent=23 // pred_check
          %p232 = pneg %p81
        $region30: #{tpu_custom_call.1} parent=23 // pred_check_branch
          %234 = sbr.rel (%p232) target = $region32
        $region31: #{tpu_custom_call.1} parent=23 // pred_region
          %s235 = smul.u32 %s19, 4
          %s236 = ssub.s32 %s235, 1
          %p237 = scmp.gt.s32.totalorder %s236, 0
          %s238 = scalar_select %p237, %s236, 0
          %p239 = scmp.lt.s32.totalorder %s18, 1
          %s240 = scalar_select %p239, %s18, 1
          %p241 = scmp.lt.s32.totalorder %s238, 15
          %s242 = scalar_select %p241, %s238, 15
          %s243 = smul.addr %s242, 2
          %s244 = smul.addr %s240, 32
          %s245 = sadd.s32 %s243, %s244
          %s246 = smul.addr %s245, 4
          %s247 = scalar_lea.vmem %s1, %s246
          %s248 = smul.u32 %s19, 4
          %s249 = ssub.s32 %s248, 1
          %p250 = scmp.gt.s32.totalorder %s249, 0
          %s251 = scalar_select %p250, %s249, 0
        $region32: #{tpu_custom_call.1} parent=23 // pred_fallthru
          _
        // Predicated region
        $region33: #{tpu_custom_call.1} parent=23 // pred_check
          %p252 = pneg %p117
        $region34: #{tpu_custom_call.1} parent=23 // pred_check_branch
          %254 = sbr.rel (%p252) target = $region36
        $region35: #{tpu_custom_call.1} parent=23 // pred_region
          %s255 = sadd.s32 %s19, 1
          %s256 = smul.u32 %s255, 4
          %p257 = scmp.lt.s32.totalorder %s256, 15
          %s258 = scalar_select %p257, %s256, 15
          %p259 = scmp.lt.s32.totalorder %s18, 1
          %s260 = scalar_select %p259, %s18, 1
          %p261 = scmp.lt.s32.totalorder %s258, 15
          %s262 = scalar_select %p261, %s258, 15
          %s263 = smul.addr %s262, 2
          %s264 = smul.addr %s260, 32
          %s265 = sadd.s32 %s263, %s264
          %s266 = smul.addr %s265, 4
          %s267 = scalar_lea.vmem %s2, %s266
          %s268 = sadd.s32 %s19, 1
          %s269 = smul.u32 %s268, 4
          %p270 = scmp.lt.s32.totalorder %s269, 15
          %s271 = scalar_select %p270, %s269, 15
        $region36: #{tpu_custom_call.1} parent=23 // pred_fallthru
          _
      $region24: #{tpu_custom_call.1} parent=5 // pred_fallthru
        _
      %p272 = scmp.le.s32.totalorder 1, %s11
      %p273 = scmp.lt.s32.totalorder %s11, 9
      %p274 = pnand %p272, %p273
      %p275 = pneg %p274
      // Predicated region
      $region37: #{tpu_custom_call.1} parent=5 // pred_check
        _
      $region38: #{tpu_custom_call.1} parent=5 // pred_check_branch
        %277 = sbr.rel (%p274) target = $region40
      $region39: #{tpu_custom_call.1} parent=5 // pred_region
        %s278 = ssub.s32 %s11, 1
        %s279 = smul.u32 4, %s21
        %p280 = scmp.lt.s32.totalorder %s20, 1
        %s281 = scalar_select %p280, %s20, 1
        %p282 = scmp.lt.s32.totalorder %s279, 15
        %s283 = scalar_select %p282, %s279, 15
        %s284 = smul.addr %s283, 2
        %s285 = smul.addr %s281, 32
        %s286 = sadd.s32 %s284, %s285
        %s287 = smul.addr %s286, 4
        %s288 = scalar_lea.vmem %s0, %s287
        %p289 = pneg %p51
        %p290 = pneg %p48
        %s291 = smul.u32 %s21, 4
        %s292 = ssub.s32 %s291, 1
        %p293 = scmp.gt.s32.totalorder %s292, 0
        %s294 = scalar_select %p293, %s292, 0
        %p295 = scmp.lt.s32.totalorder %s20, 1
        %s296 = scalar_select %p295, %s20, 1
        %p297 = scmp.lt.s32.totalorder %s294, 15
        %s298 = scalar_select %p297, %s294, 15
        %s299 = smul.addr %s298, 2
        %s300 = smul.addr %s296, 32
        %s301 = sadd.s32 %s299, %s300
        %s302 = smul.addr %s301, 4
        %s303 = scalar_lea.vmem %s1, %s302
        %p304 = pneg %p87
        %p305 = pneg %p84
        %s306 = sadd.s32 %s21, 1
        %s307 = smul.u32 %s306, 4
        %p308 = scmp.lt.s32.totalorder %s307, 15
        %s309 = scalar_select %p308, %s307, 15
        %p310 = scmp.lt.s32.totalorder %s20, 1
        %s311 = scalar_select %p310, %s20, 1
        %p312 = scmp.lt.s32.totalorder %s309, 15
        %s313 = scalar_select %p312, %s309, 15
        %s314 = smul.addr %s313, 2
        %s315 = smul.addr %s311, 32
        %s316 = sadd.s32 %s314, %s315
        %s317 = smul.addr %s316, 4
        %s318 = scalar_lea.vmem %s2, %s317
        %p319 = pneg %p123
        %p320 = pneg %p120
        %p321 = pneg %p144
        %p322 = pneg %p141
        %p323 = pneg %p165
        %p324 = pneg %p162
        %p325 = pneg %p193
        %p326 = pneg %p190
        %s327 = sand.u32 %s180, 1
        %s328 = sand.u32 %s180, 1
        %s329 = smul.addr %s328, 128
        %s330 = scalar_lea.vmem [#allocation2], %s329
        %s331 = smul.u32 4, %s21
        %p332 = scmp.lt.s32.totalorder %s20, 1
        %s333 = scalar_select %p332, %s20, 1
        %p334 = scmp.lt.s32.totalorder %s331, 15
        %s335 = scalar_select %p334, %s331, 15
        %s336 = smul.addr %s335, 2
        %s337 = smul.addr %s333, 32
        %s338 = sadd.s32 %s336, %s337
        %s339 = smul.addr %s338, 4
        %s340 = scalar_lea.vmem %s0, %s339
        %s341 = smul.u32 4, %s21
        %s342 = smul.u32 %s21, 4
        %s343 = ssub.s32 %s342, 1
        %p344 = scmp.gt.s32.totalorder %s343, 0
        %s345 = scalar_select %p344, %s343, 0
        %p346 = scmp.lt.s32.totalorder %s20, 1
        %s347 = scalar_select %p346, %s20, 1
        %p348 = scmp.lt.s32.totalorder %s345, 15
        %s349 = scalar_select %p348, %s345, 15
        %s350 = smul.addr %s349, 2
        %s351 = smul.addr %s347, 32
        %s352 = sadd.s32 %s350, %s351
        %s353 = smul.addr %s352, 4
        %s354 = scalar_lea.vmem %s1, %s353
        %s355 = smul.u32 %s21, 4
        %s356 = ssub.s32 %s355, 1
        %p357 = scmp.gt.s32.totalorder %s356, 0
        %s358 = scalar_select %p357, %s356, 0
        %s359 = sadd.s32 %s21, 1
        %s360 = smul.u32 %s359, 4
        %p361 = scmp.lt.s32.totalorder %s360, 15
        %s362 = scalar_select %p361, %s360, 15
        %p363 = scmp.lt.s32.totalorder %s20, 1
        %s364 = scalar_select %p363, %s20, 1
        %p365 = scmp.lt.s32.totalorder %s362, 15
        %s366 = scalar_select %p365, %s362, 15
        %s367 = smul.addr %s366, 2
        %s368 = smul.addr %s364, 32
        %s369 = sadd.s32 %s367, %s368
        %s370 = smul.addr %s369, 4
        %s371 = scalar_lea.vmem %s2, %s370
        %s372 = sadd.s32 %s21, 1
        %s373 = smul.u32 %s372, 4
        %p374 = scmp.lt.s32.totalorder %s373, 15
        %s375 = scalar_select %p374, %s373, 15
        %s376 = smul.u32 16, %s21
        %v378 = vld [vmem:[%s340] sm:$0xf]
        %v379 = vld [vmem:[%s340 + $0x4] sm:$0xf]
        %v380 = vld [vmem:[%s340 + $0x8] sm:$0xf]
        %v381 = vld [vmem:[%s340 + $0xc] sm:$0xf]
        %v382 = vld [vmem:[%s340 + $0x10] sm:$0xf]
        %v383 = vld [vmem:[%s340 + $0x14] sm:$0xf]
        %v384 = vld [vmem:[%s340 + $0x18] sm:$0xf]
        %v385 = vld [vmem:[%s340 + $0x1c] sm:$0xf]
        %v386 = vunpack.c.l.bf16 %v378
        %v387 = vunpack.c.l.bf16 %v379
        %v388 = vunpack.c.l.bf16 %v380
        %v389 = vunpack.c.l.bf16 %v381
        %v390 = vunpack.c.l.bf16 %v382
        %v391 = vunpack.c.l.bf16 %v383
        %v392 = vunpack.c.l.bf16 %v384
        %v393 = vunpack.c.l.bf16 %v385
        %v394 = vld [vmem:[%s354] sm:$0xf]
        %v395 = vld [vmem:[%s354 + $0x4] sm:$0xf]
        %v396 = vunpack.c.l.bf16 %v394
        %v397 = vunpack.c.l.bf16 %v395
        %v398 = vld [vmem:[%s371] sm:$0xf]
        %v399 = vld [vmem:[%s371 + $0x4] sm:$0xf]
        %v400 = vunpack.c.l.bf16 %v398
        %v401 = vunpack.c.l.bf16 %v399
        %v402 = vmul.f32 %v386, 0.75
        %v403 = vmul.f32 %v387, 0.75
        %v404 = vmul.f32 %v388, 0.75
        %v405 = vmul.f32 %v389, 0.75
        %v406 = vmul.f32 %v390, 0.75
        %v407 = vmul.f32 %v391, 0.75
        %v408 = vmul.f32 %v392, 0.75
        %v409 = vmul.f32 %v393, 0.75
        %v410 = vmul.f32 %v396, 0.25
        %v411 = vmul.f32 %v397, 0.25
        %v412 = vmul.f32 %v386, 0.25
        %v413 = vmul.f32 %v387, 0.25
        %v414 = vmul.f32 %v388, 0.25
        %v415 = vmul.f32 %v389, 0.25
        %v416 = vmul.f32 %v390, 0.25
        %v417 = vmul.f32 %v391, 0.25
        %v418 = vadd.f32 %v402, %v410
        %v419 = vadd.f32 %v403, %v411
        %v420 = vadd.f32 %v404, %v412
        %v421 = vadd.f32 %v405, %v413
        %v422 = vadd.f32 %v406, %v414
        %v423 = vadd.f32 %v407, %v415
        %v424 = vadd.f32 %v408, %v416
        %v425 = vadd.f32 %v409, %v417
        %v426 = vmul.f32 %v392, 0.25
        %v427 = vmul.f32 %v393, 0.25
        %v428 = vmul.f32 %v400, 0.25
        %v429 = vmul.f32 %v401, 0.25
        %v430 = vadd.f32 %v402, %v414
        %v431 = vadd.f32 %v403, %v415
        %v432 = vadd.f32 %v404, %v416
        %v433 = vadd.f32 %v405, %v417
        %v434 = vadd.f32 %v406, %v426
        %v435 = vadd.f32 %v407, %v427
        %v436 = vadd.f32 %v408, %v428
        %v437 = vadd.f32 %v409, %v429
        %v438 = vmul.f32 %v396, 0.75
        %v439 = vmul.f32 %v397, 0.75
        %v440 = vadd.f32 %v438, %v412
        %v441 = vadd.f32 %v439, %v413
        %v442 = vmul.f32 %v400, 0.75
        %v443 = vmul.f32 %v401, 0.75
        %v444 = vadd.f32 %v442, %v426
        %v445 = vadd.f32 %v443, %v427
        %p446 = scmp.eq.s32.totalorder %s21, 0
        %s447 = scalar_select %p446, 0.0, 1.0
        %v448 = vstv %s447
        %v449 = vmul.f32 %v440, %v448
        %v450 = vmul.f32 %v441, %v448
        %p451 = scmp.eq.s32.totalorder %s21, 3
        %s452 = scalar_select %p451, 0.0, 1.0
        %v453 = vstv %s452
        %v454 = vmul.f32 %v444, %v453
        %v455 = vmul.f32 %v445, %v453
        %vm476 = vcmask 1040384
        %v477 = vrot.slane %v449, 7
        %v478 = vrot.slane %v450, 7
        %v479 = vsel %vm476, %v477, %v478
        %v480 = vrot.slane %v418, 7
        %v481 = vrot.slane %v419, 7
        %v482 = vsel %vm476, %v480, %v481
        %v483 = vrot.slane %v430, 7
        %v484 = vrot.slane %v431, 7
        %v485 = vsel %vm476, %v483, %v484
        %v486 = vrot.slane %v420, 7
        %v487 = vrot.slane %v421, 7
        %v488 = vsel %vm476, %v486, %v487
        %v489 = vrot.slane %v432, 7
        %v490 = vrot.slane %v433, 7
        %v491 = vsel %vm476, %v489, %v490
        %v492 = vrot.slane %v422, 7
        %v493 = vrot.slane %v423, 7
        %v494 = vsel %vm476, %v492, %v493
        %v495 = vrot.slane %v434, 7
        %v496 = vrot.slane %v435, 7
        %v497 = vsel %vm476, %v495, %v496
        %v498 = vrot.slane %v424, 7
        %v499 = vrot.slane %v425, 7
        %v500 = vsel %vm476, %v498, %v499
        %v501 = vrot.slane %v436, 7
        %v502 = vrot.slane %v437, 7
        %v503 = vsel %vm476, %v501, %v502
        %v504 = vrot.slane %v454, 7
        %v505 = vrot.slane %v455, 7
        %v506 = vsel %vm476, %v504, %v505
        %v527 = vsel %vm476, %v449, %v477
        %v528 = vsel %vm476, %v418, %v480
        %v529 = vsel %vm476, %v430, %v483
        %v530 = vsel %vm476, %v420, %v486
        %v531 = vsel %vm476, %v432, %v489
        %v532 = vsel %vm476, %v422, %v492
        %v533 = vsel %vm476, %v434, %v495
        %v534 = vsel %vm476, %v424, %v498
        %v535 = vsel %vm476, %v436, %v501
        %v536 = vsel %vm476, %v454, %v504
        %vm537 = vcmask 1046528
        %v538 = vrot.slane %v449, 1
        %v539 = vrot.slane %v450, 1
        %v540 = vsel %vm537, %v538, %v539
        %v541 = vrot.slane %v418, 1
        %v542 = vrot.slane %v419, 1
        %v543 = vsel %vm537, %v541, %v542
        %v544 = vrot.slane %v430, 1
        %v545 = vrot.slane %v431, 1
        %v546 = vsel %vm537, %v544, %v545
        %v547 = vrot.slane %v420, 1
        %v548 = vrot.slane %v421, 1
        %v549 = vsel %vm537, %v547, %v548
        %v550 = vrot.slane %v432, 1
        %v551 = vrot.slane %v433, 1
        %v552 = vsel %vm537, %v550, %v551
        %v553 = vrot.slane %v422, 1
        %v554 = vrot.slane %v423, 1
        %v555 = vsel %vm537, %v553, %v554
        %v556 = vrot.slane %v434, 1
        %v557 = vrot.slane %v435, 1
        %v558 = vsel %vm537, %v556, %v557
        %v559 = vrot.slane %v424, 1
        %v560 = vrot.slane %v425, 1
        %v561 = vsel %vm537, %v559, %v560
        %v562 = vrot.slane %v436, 1
        %v563 = vrot.slane %v437, 1
        %v564 = vsel %vm537, %v562, %v563
        %v565 = vrot.slane %v454, 1
        %v566 = vrot.slane %v455, 1
        %v567 = vsel %vm537, %v565, %v566
        %v588 = vsel %vm537, %v539, %v450
        %v589 = vsel %vm537, %v542, %v419
        %v590 = vsel %vm537, %v545, %v431
        %v591 = vsel %vm537, %v548, %v421
        %v592 = vsel %vm537, %v551, %v433
        %v593 = vsel %vm537, %v554, %v423
        %v594 = vsel %vm537, %v557, %v435
        %v595 = vsel %vm537, %v560, %v425
        %v596 = vsel %vm537, %v563, %v437
        %v597 = vsel %vm537, %v566, %v455
        %v598 = vmul.f32 %v449, 0.75
        %v599 = vmul.f32 %v450, 0.75
        %v600 = vmul.f32 %v418, 0.75
        %v601 = vmul.f32 %v419, 0.75
        %v602 = vmul.f32 %v430, 0.75
        %v603 = vmul.f32 %v431, 0.75
        %v604 = vmul.f32 %v420, 0.75
        %v605 = vmul.f32 %v421, 0.75
        %v606 = vmul.f32 %v432, 0.75
        %v607 = vmul.f32 %v433, 0.75
        %v608 = vmul.f32 %v422, 0.75
        %v609 = vmul.f32 %v423, 0.75
        %v610 = vmul.f32 %v434, 0.75
        %v611 = vmul.f32 %v435, 0.75
        %v612 = vmul.f32 %v424, 0.75
        %v613 = vmul.f32 %v425, 0.75
        %v614 = vmul.f32 %v436, 0.75
        %v615 = vmul.f32 %v437, 0.75
        %v616 = vmul.f32 %v454, 0.75
        %v617 = vmul.f32 %v455, 0.75
        %v618 = vmul.f32 %v527, 0.25
        %v619 = vmul.f32 %v479, 0.25
        %v620 = vmul.f32 %v528, 0.25
        %v621 = vmul.f32 %v482, 0.25
        %v622 = vmul.f32 %v529, 0.25
        %v623 = vmul.f32 %v485, 0.25
        %v624 = vmul.f32 %v530, 0.25
        %v625 = vmul.f32 %v488, 0.25
        %v626 = vmul.f32 %v531, 0.25
        %v627 = vmul.f32 %v491, 0.25
        %v628 = vmul.f32 %v532, 0.25
        %v629 = vmul.f32 %v494, 0.25
        %v630 = vmul.f32 %v533, 0.25
        %v631 = vmul.f32 %v497, 0.25
        %v632 = vmul.f32 %v534, 0.25
        %v633 = vmul.f32 %v500, 0.25
        %v634 = vmul.f32 %v535, 0.25
        %v635 = vmul.f32 %v503, 0.25
        %v636 = vmul.f32 %v536, 0.25
        %v637 = vmul.f32 %v506, 0.25
        %v638 = vadd.f32 %v598, %v618
        %v639 = vadd.f32 %v599, %v619
        %v640 = vadd.f32 %v600, %v620
        %v641 = vadd.f32 %v601, %v621
        %v642 = vadd.f32 %v602, %v622
        %v643 = vadd.f32 %v603, %v623
        %v644 = vadd.f32 %v604, %v624
        %v645 = vadd.f32 %v605, %v625
        %v646 = vadd.f32 %v606, %v626
        %v647 = vadd.f32 %v607, %v627
        %v648 = vadd.f32 %v608, %v628
        %v649 = vadd.f32 %v609, %v629
        %v650 = vadd.f32 %v610, %v630
        %v651 = vadd.f32 %v611, %v631
        %v652 = vadd.f32 %v612, %v632
        %v653 = vadd.f32 %v613, %v633
        %v654 = vadd.f32 %v614, %v634
        %v655 = vadd.f32 %v615, %v635
        %v656 = vadd.f32 %v616, %v636
        %v657 = vadd.f32 %v617, %v637
        %v658 = vmul.f32 %v540, 0.25
        %v659 = vmul.f32 %v588, 0.25
        %v660 = vmul.f32 %v543, 0.25
        %v661 = vmul.f32 %v589, 0.25
        %v662 = vmul.f32 %v546, 0.25
        %v663 = vmul.f32 %v590, 0.25
        %v664 = vmul.f32 %v549, 0.25
        %v665 = vmul.f32 %v591, 0.25
        %v666 = vmul.f32 %v552, 0.25
        %v667 = vmul.f32 %v592, 0.25
        %v668 = vmul.f32 %v555, 0.25
        %v669 = vmul.f32 %v593, 0.25
        %v670 = vmul.f32 %v558, 0.25
        %v671 = vmul.f32 %v594, 0.25
        %v672 = vmul.f32 %v561, 0.25
        %v673 = vmul.f32 %v595, 0.25
        %v674 = vmul.f32 %v564, 0.25
        %v675 = vmul.f32 %v596, 0.25
        %v676 = vmul.f32 %v567, 0.25
        %v677 = vmul.f32 %v597, 0.25
        %v678 = vadd.f32 %v598, %v658
        %v679 = vadd.f32 %v599, %v659
        %v680 = vadd.f32 %v600, %v660
        %v681 = vadd.f32 %v601, %v661
        %v682 = vadd.f32 %v602, %v662
        %v683 = vadd.f32 %v603, %v663
        %v684 = vadd.f32 %v604, %v664
        %v685 = vadd.f32 %v605, %v665
        %v686 = vadd.f32 %v606, %v666
        %v687 = vadd.f32 %v607, %v667
        %v688 = vadd.f32 %v608, %v668
        %v689 = vadd.f32 %v609, %v669
        %v690 = vadd.f32 %v610, %v670
        %v691 = vadd.f32 %v611, %v671
        %v692 = vadd.f32 %v612, %v672
        %v693 = vadd.f32 %v613, %v673
        %v694 = vadd.f32 %v614, %v674
        %v695 = vadd.f32 %v615, %v675
        %v696 = vadd.f32 %v616, %v676
        %v697 = vadd.f32 %v617, %v677
        %v718 = vrot.slane %v678, 7
        %v719 = vrot.slane %v679, 7
        %v720 = vsel %vm476, %v718, %v719
        %v721 = vrot.slane %v680, 7
        %v722 = vrot.slane %v681, 7
        %v723 = vsel %vm476, %v721, %v722
        %v724 = vrot.slane %v682, 7
        %v725 = vrot.slane %v683, 7
        %v726 = vsel %vm476, %v724, %v725
        %v727 = vrot.slane %v684, 7
        %v728 = vrot.slane %v685, 7
        %v729 = vsel %vm476, %v727, %v728
        %v730 = vrot.slane %v686, 7
        %v731 = vrot.slane %v687, 7
        %v732 = vsel %vm476, %v730, %v731
        %v733 = vrot.slane %v688, 7
        %v734 = vrot.slane %v689, 7
        %v735 = vsel %vm476, %v733, %v734
        %v736 = vrot.slane %v690, 7
        %v737 = vrot.slane %v691, 7
        %v738 = vsel %vm476, %v736, %v737
        %v739 = vrot.slane %v692, 7
        %v740 = vrot.slane %v693, 7
        %v741 = vsel %vm476, %v739, %v740
        %v742 = vrot.slane %v694, 7
        %v743 = vrot.slane %v695, 7
        %v744 = vsel %vm476, %v742, %v743
        %v745 = vrot.slane %v696, 7
        %v746 = vrot.slane %v697, 7
        %v747 = vsel %vm476, %v745, %v746
        %v768 = vsel %vm476, 0.0, %v718
        %v769 = vsel %vm476, 0.0, %v721
        %v770 = vsel %vm476, 0.0, %v724
        %v771 = vsel %vm476, 0.0, %v727
        %v772 = vsel %vm476, 0.0, %v730
        %v773 = vsel %vm476, 0.0, %v733
        %v774 = vsel %vm476, 0.0, %v736
        %v775 = vsel %vm476, 0.0, %v739
        %v776 = vsel %vm476, 0.0, %v742
        %v777 = vsel %vm476, 0.0, %v745
        %v798 = vrot.slane %v638, 1
        %v799 = vrot.slane %v639, 1
        %v800 = vsel %vm537, %v798, %v799
        %v801 = vrot.slane %v640, 1
        %v802 = vrot.slane %v641, 1
        %v803 = vsel %vm537, %v801, %v802
        %v804 = vrot.slane %v642, 1
        %v805 = vrot.slane %v643, 1
        %v806 = vsel %vm537, %v804, %v805
        %v807 = vrot.slane %v644, 1
        %v808 = vrot.slane %v645, 1
        %v809 = vsel %vm537, %v807, %v808
        %v810 = vrot.slane %v646, 1
        %v811 = vrot.slane %v647, 1
        %v812 = vsel %vm537, %v810, %v811
        %v813 = vrot.slane %v648, 1
        %v814 = vrot.slane %v649, 1
        %v815 = vsel %vm537, %v813, %v814
        %v816 = vrot.slane %v650, 1
        %v817 = vrot.slane %v651, 1
        %v818 = vsel %vm537, %v816, %v817
        %v819 = vrot.slane %v652, 1
        %v820 = vrot.slane %v653, 1
        %v821 = vsel %vm537, %v819, %v820
        %v822 = vrot.slane %v654, 1
        %v823 = vrot.slane %v655, 1
        %v824 = vsel %vm537, %v822, %v823
        %v825 = vrot.slane %v656, 1
        %v826 = vrot.slane %v657, 1
        %v827 = vsel %vm537, %v825, %v826
        %v838 = vsel %vm537, %v799, 0.0
        %v839 = vsel %vm537, %v802, 0.0
        %v840 = vsel %vm537, %v805, 0.0
        %v841 = vsel %vm537, %v808, 0.0
        %v842 = vsel %vm537, %v811, 0.0
        %v843 = vsel %vm537, %v814, 0.0
        %v844 = vsel %vm537, %v817, 0.0
        %v845 = vsel %vm537, %v820, 0.0
        %v846 = vsel %vm537, %v823, 0.0
        %v847 = vsel %vm537, %v826, 0.0
        %848 = vrot.lane.b32.xlu0 %v638, 4
        %v849 = vpop.permute.xlu0 %848
        %850 = vrot.lane.b32.xlu0 %v639, 4
        %v851 = vpop.permute.xlu0 %850
        %852 = vrot.lane.b32.xlu0 %v640, 4
        %v853 = vpop.permute.xlu0 %852
        %854 = vrot.lane.b32.xlu0 %v641, 4
        %v855 = vpop.permute.xlu0 %854
        %856 = vrot.lane.b32.xlu0 %v642, 4
        %v857 = vpop.permute.xlu0 %856
        %858 = vrot.lane.b32.xlu0 %v643, 4
        %v859 = vpop.permute.xlu0 %858
        %860 = vrot.lane.b32.xlu0 %v644, 4
        %v861 = vpop.permute.xlu0 %860
        %862 = vrot.lane.b32.xlu0 %v645, 4
        %v863 = vpop.permute.xlu0 %862
        %864 = vrot.lane.b32.xlu0 %v646, 4
        %v865 = vpop.permute.xlu0 %864
        %866 = vrot.lane.b32.xlu0 %v647, 4
        %v867 = vpop.permute.xlu0 %866
        %868 = vrot.lane.b32.xlu0 %v648, 4
        %v869 = vpop.permute.xlu0 %868
        %870 = vrot.lane.b32.xlu0 %v649, 4
        %v871 = vpop.permute.xlu0 %870
        %872 = vrot.lane.b32.xlu0 %v650, 4
        %v873 = vpop.permute.xlu0 %872
        %874 = vrot.lane.b32.xlu0 %v651, 4
        %v875 = vpop.permute.xlu0 %874
        %876 = vrot.lane.b32.xlu0 %v652, 4
        %v877 = vpop.permute.xlu0 %876
        %878 = vrot.lane.b32.xlu0 %v653, 4
        %v879 = vpop.permute.xlu0 %878
        %880 = vrot.lane.b32.xlu0 %v654, 4
        %v881 = vpop.permute.xlu0 %880
        %882 = vrot.lane.b32.xlu0 %v655, 4
        %v883 = vpop.permute.xlu0 %882
        %884 = vrot.lane.b32.xlu0 %v656, 4
        %v885 = vpop.permute.xlu0 %884
        %886 = vrot.lane.b32.xlu0 %v657, 4
        %v887 = vpop.permute.xlu0 %886
        %908 = vrot.lane.b32.xlu0 %v678, 8
        %v909 = vpop.permute.xlu0 %908
        %910 = vrot.lane.b32.xlu0 %v679, 8
        %v911 = vpop.permute.xlu0 %910
        %912 = vrot.lane.b32.xlu0 %v680, 8
        %v913 = vpop.permute.xlu0 %912
        %914 = vrot.lane.b32.xlu0 %v681, 8
        %v915 = vpop.permute.xlu0 %914
        %916 = vrot.lane.b32.xlu0 %v682, 8
        %v917 = vpop.permute.xlu0 %916
        %918 = vrot.lane.b32.xlu0 %v683, 8
        %v919 = vpop.permute.xlu0 %918
        %920 = vrot.lane.b32.xlu0 %v684, 8
        %v921 = vpop.permute.xlu0 %920
        %922 = vrot.lane.b32.xlu0 %v685, 8
        %v923 = vpop.permute.xlu0 %922
        %924 = vrot.lane.b32.xlu0 %v686, 8
        %v925 = vpop.permute.xlu0 %924
        %926 = vrot.lane.b32.xlu0 %v687, 8
        %v927 = vpop.permute.xlu0 %926
        %928 = vrot.lane.b32.xlu0 %v688, 8
        %v929 = vpop.permute.xlu0 %928
        %930 = vrot.lane.b32.xlu0 %v689, 8
        %v931 = vpop.permute.xlu0 %930
        %932 = vrot.lane.b32.xlu0 %v690, 8
        %v933 = vpop.permute.xlu0 %932
        %934 = vrot.lane.b32.xlu0 %v691, 8
        %v935 = vpop.permute.xlu0 %934
        %936 = vrot.lane.b32.xlu0 %v692, 8
        %v937 = vpop.permute.xlu0 %936
        %938 = vrot.lane.b32.xlu0 %v693, 8
        %v939 = vpop.permute.xlu0 %938
        %940 = vrot.lane.b32.xlu0 %v694, 8
        %v941 = vpop.permute.xlu0 %940
        %942 = vrot.lane.b32.xlu0 %v695, 8
        %v943 = vpop.permute.xlu0 %942
        %944 = vrot.lane.b32.xlu0 %v696, 8
        %v945 = vpop.permute.xlu0 %944
        %946 = vrot.lane.b32.xlu0 %v697, 8
        %v947 = vpop.permute.xlu0 %946
        %vm968 = vcmask 31744
        %v969 = vsel %vm968, %v768, %v849
        %v970 = vsel %vm968, %v720, %v851
        %v971 = vsel %vm968, %v769, %v853
        %v972 = vsel %vm968, %v723, %v855
        %v973 = vsel %vm968, %v770, %v857
        %v974 = vsel %vm968, %v726, %v859
        %v975 = vsel %vm968, %v771, %v861
        %v976 = vsel %vm968, %v729, %v863
        %v977 = vsel %vm968, %v772, %v865
        %v978 = vsel %vm968, %v732, %v867
        %v979 = vsel %vm968, %v773, %v869
        %v980 = vsel %vm968, %v735, %v871
        %v981 = vsel %vm968, %v774, %v873
        %v982 = vsel %vm968, %v738, %v875
        %v983 = vsel %vm968, %v775, %v877
        %v984 = vsel %vm968, %v741, %v879
        %v985 = vsel %vm968, %v776, %v881
        %v986 = vsel %vm968, %v744, %v883
        %v987 = vsel %vm968, %v777, %v885
        %v988 = vsel %vm968, %v747, %v887
        %vm989 = vcmask 64512
        %v990 = vsel %vm989, %v969, %v909
        %v991 = vsel %vm989, %v970, %v911
        %v992 = vsel %vm989, %v971, %v913
        %v993 = vsel %vm989, %v972, %v915
        %v994 = vsel %vm989, %v973, %v917
        %v995 = vsel %vm989, %v974, %v919
        %v996 = vsel %vm989, %v975, %v921
        %v997 = vsel %vm989, %v976, %v923
        %v998 = vsel %vm989, %v977, %v925
        %v999 = vsel %vm989, %v978, %v927
        %v1000 = vsel %vm989, %v979, %v929
        %v1001 = vsel %vm989, %v980, %v931
        %v1002 = vsel %vm989, %v981, %v933
        %v1003 = vsel %vm989, %v982, %v935
        %v1004 = vsel %vm989, %v983, %v937
        %v1005 = vsel %vm989, %v984, %v939
        %v1006 = vsel %vm989, %v985, %v941
        %v1007 = vsel %vm989, %v986, %v943
        %v1008 = vsel %vm989, %v987, %v945
        %v1009 = vsel %vm989, %v988, %v947
        %v1010 = vpack.c.bf16 %v991, %v990
        %v1011 = vpack.c.bf16 %v993, %v992
        %v1012 = vpack.c.bf16 %v995, %v994
        %v1013 = vpack.c.bf16 %v997, %v996
        %v1014 = vpack.c.bf16 %v999, %v998
        %v1015 = vpack.c.bf16 %v1001, %v1000
        %v1016 = vpack.c.bf16 %v1003, %v1002
        %v1017 = vpack.c.bf16 %v1005, %v1004
        %v1018 = vpack.c.bf16 %v1007, %v1006
        %v1019 = vpack.c.bf16 %v1009, %v1008
        %1020 = vrot.lane.b32.xlu0 %v678, 4
        %v1021 = vpop.permute.xlu0 %1020
        %1022 = vrot.lane.b32.xlu0 %v679, 4
        %v1023 = vpop.permute.xlu0 %1022
        %1024 = vrot.lane.b32.xlu0 %v680, 4
        %v1025 = vpop.permute.xlu0 %1024
        %1026 = vrot.lane.b32.xlu0 %v681, 4
        %v1027 = vpop.permute.xlu0 %1026
        %1028 = vrot.lane.b32.xlu0 %v682, 4
        %v1029 = vpop.permute.xlu0 %1028
        %1030 = vrot.lane.b32.xlu0 %v683, 4
        %v1031 = vpop.permute.xlu0 %1030
        %1032 = vrot.lane.b32.xlu0 %v684, 4
        %v1033 = vpop.permute.xlu0 %1032
        %1034 = vrot.lane.b32.xlu0 %v685, 4
        %v1035 = vpop.permute.xlu0 %1034
        %1036 = vrot.lane.b32.xlu0 %v686, 4
        %v1037 = vpop.permute.xlu0 %1036
        %1038 = vrot.lane.b32.xlu0 %v687, 4
        %v1039 = vpop.permute.xlu0 %1038
        %1040 = vrot.lane.b32.xlu0 %v688, 4
        %v1041 = vpop.permute.xlu0 %1040
        %1042 = vrot.lane.b32.xlu0 %v689, 4
        %v1043 = vpop.permute.xlu0 %1042
        %1044 = vrot.lane.b32.xlu0 %v690, 4
        %v1045 = vpop.permute.xlu0 %1044
        %1046 = vrot.lane.b32.xlu0 %v691, 4
        %v1047 = vpop.permute.xlu0 %1046
        %1048 = vrot.lane.b32.xlu0 %v692, 4
        %v1049 = vpop.permute.xlu0 %1048
        %1050 = vrot.lane.b32.xlu0 %v693, 4
        %v1051 = vpop.permute.xlu0 %1050
        %1052 = vrot.lane.b32.xlu0 %v694, 4
        %v1053 = vpop.permute.xlu0 %1052
        %1054 = vrot.lane.b32.xlu0 %v695, 4
        %v1055 = vpop.permute.xlu0 %1054
        %1056 = vrot.lane.b32.xlu0 %v696, 4
        %v1057 = vpop.permute.xlu0 %1056
        %1058 = vrot.lane.b32.xlu0 %v697, 4
        %v1059 = vpop.permute.xlu0 %1058
        %1090 = vrot.lane.b32.xlu0 %v800, 8
        %v1091 = vpop.permute.xlu0 %1090
        %1092 = vrot.lane.b32.xlu0 %v838, 8
        %v1093 = vpop.permute.xlu0 %1092
        %1094 = vrot.lane.b32.xlu0 %v803, 8
        %v1095 = vpop.permute.xlu0 %1094
        %1096 = vrot.lane.b32.xlu0 %v839, 8
        %v1097 = vpop.permute.xlu0 %1096
        %1098 = vrot.lane.b32.xlu0 %v806, 8
        %v1099 = vpop.permute.xlu0 %1098
        %1100 = vrot.lane.b32.xlu0 %v840, 8
        %v1101 = vpop.permute.xlu0 %1100
        %1102 = vrot.lane.b32.xlu0 %v809, 8
        %v1103 = vpop.permute.xlu0 %1102
        %1104 = vrot.lane.b32.xlu0 %v841, 8
        %v1105 = vpop.permute.xlu0 %1104
        %1106 = vrot.lane.b32.xlu0 %v812, 8
        %v1107 = vpop.permute.xlu0 %1106
        %1108 = vrot.lane.b32.xlu0 %v842, 8
        %v1109 = vpop.permute.xlu0 %1108
        %1110 = vrot.lane.b32.xlu0 %v815, 8
        %v1111 = vpop.permute.xlu0 %1110
        %1112 = vrot.lane.b32.xlu0 %v843, 8
        %v1113 = vpop.permute.xlu0 %1112
        %1114 = vrot.lane.b32.xlu0 %v818, 8
        %v1115 = vpop.permute.xlu0 %1114
        %1116 = vrot.lane.b32.xlu0 %v844, 8
        %v1117 = vpop.permute.xlu0 %1116
        %1118 = vrot.lane.b32.xlu0 %v821, 8
        %v1119 = vpop.permute.xlu0 %1118
        %1120 = vrot.lane.b32.xlu0 %v845, 8
        %v1121 = vpop.permute.xlu0 %1120
        %1122 = vrot.lane.b32.xlu0 %v824, 8
        %v1123 = vpop.permute.xlu0 %1122
        %1124 = vrot.lane.b32.xlu0 %v846, 8
        %v1125 = vpop.permute.xlu0 %1124
        %1126 = vrot.lane.b32.xlu0 %v827, 8
        %v1127 = vpop.permute.xlu0 %1126
        %1128 = vrot.lane.b32.xlu0 %v847, 8
        %v1129 = vpop.permute.xlu0 %1128
        %v1150 = vsel %vm968, %v638, %v1021
        %v1151 = vsel %vm968, %v639, %v1023
        %v1152 = vsel %vm968, %v640, %v1025
        %v1153 = vsel %vm968, %v641, %v1027
        %v1154 = vsel %vm968, %v642, %v1029
        %v1155 = vsel %vm968, %v643, %v1031
        %v1156 = vsel %vm968, %v644, %v1033
        %v1157 = vsel %vm968, %v645, %v1035
        %v1158 = vsel %vm968, %v646, %v1037
        %v1159 = vsel %vm968, %v647, %v1039
        %v1160 = vsel %vm968, %v648, %v1041
        %v1161 = vsel %vm968, %v649, %v1043
        %v1162 = vsel %vm968, %v650, %v1045
        %v1163 = vsel %vm968, %v651, %v1047
        %v1164 = vsel %vm968, %v652, %v1049
        %v1165 = vsel %vm968, %v653, %v1051
        %v1166 = vsel %vm968, %v654, %v1053
        %v1167 = vsel %vm968, %v655, %v1055
        %v1168 = vsel %vm968, %v656, %v1057
        %v1169 = vsel %vm968, %v657, %v1059
        %v1170 = vsel %vm989, %v1150, %v1091
        %v1171 = vsel %vm989, %v1151, %v1093
        %v1172 = vsel %vm989, %v1152, %v1095
        %v1173 = vsel %vm989, %v1153, %v1097
        %v1174 = vsel %vm989, %v1154, %v1099
        %v1175 = vsel %vm989, %v1155, %v1101
        %v1176 = vsel %vm989, %v1156, %v1103
        %v1177 = vsel %vm989, %v1157, %v1105
        %v1178 = vsel %vm989, %v1158, %v1107
        %v1179 = vsel %vm989, %v1159, %v1109
        %v1180 = vsel %vm989, %v1160, %v1111
        %v1181 = vsel %vm989, %v1161, %v1113
        %v1182 = vsel %vm989, %v1162, %v1115
        %v1183 = vsel %vm989, %v1163, %v1117
        %v1184 = vsel %vm989, %v1164, %v1119
        %v1185 = vsel %vm989, %v1165, %v1121
        %v1186 = vsel %vm989, %v1166, %v1123
        %v1187 = vsel %vm989, %v1167, %v1125
        %v1188 = vsel %vm989, %v1168, %v1127
        %v1189 = vsel %vm989, %v1169, %v1129
        %v1190 = vpack.c.bf16 %v1171, %v1170
        %v1191 = vpack.c.bf16 %v1173, %v1172
        %v1192 = vpack.c.bf16 %v1175, %v1174
        %v1193 = vpack.c.bf16 %v1177, %v1176
        %v1194 = vpack.c.bf16 %v1179, %v1178
        %v1195 = vpack.c.bf16 %v1181, %v1180
        %v1196 = vpack.c.bf16 %v1183, %v1182
        %v1197 = vpack.c.bf16 %v1185, %v1184
        %v1198 = vpack.c.bf16 %v1187, %v1186
        %v1199 = vpack.c.bf16 %v1189, %v1188
        %v1200 = vld [vmem:[%s3] sm:$0xf]
        %v1201 = vld [vmem:[%s3 + $0x4] sm:$0x3]
        %v1204 = vunpack.c.l.b16 %v1200
        %v1205 = vunpack.c.l.b16 %v1201
        %v1206 = vpack.c.b16 %v1205, %v1204
        %vm1207 = vcmask 97280
        %v1209 = vsel %vm1207, %v1010, 0
        %v1212 = vsel %vm1207, %v1011, 0
        %v1215 = vsel %vm1207, %v1012, 0
        %v1218 = vsel %vm1207, %v1013, 0
        %v1221 = vsel %vm1207, %v1014, 0
        %v1224 = vsel %vm1207, %v1015, 0
        %v1227 = vsel %vm1207, %v1016, 0
        %v1230 = vsel %vm1207, %v1017, 0
        %v1233 = vsel %vm1207, %v1018, 0
        %v1236 = vsel %vm1207, %v1019, 0
        %vm1238 = vcmask 1045504
        %v1240 = vsel %vm1238, %v1206, 0
        %1242 = vmatprep.subr.bf16.mxu0 0
        %1243 = vmatpush1.bf16.msra.mxu0 0
        %1244 = vmatprep.subr.bf16.mxu0 0
        %1245 = vmatpush1.bf16.msra.mxu0 0
        %1246 = vmatprep.subr.bf16.mxu0 0
        %1247 = vmatpush1.bf16.msra.mxu0 0
        %1248 = vmatprep.subr.bf16.mxu0 0
        %1249 = vmatpush1.bf16.msra.mxu0 0
        %1250 = vmatprep.subr.bf16.mxu0 0
        %1251 = vmatpush1.bf16.msra.mxu0 0
        %1252 = vmatprep.subr.bf16.mxu0 0
        %1253 = vmatpush1.bf16.msra.mxu0 0
        %1254 = vmatprep.subr.bf16.mxu0 0
        %1255 = vmatpush1.bf16.msra.mxu0 0
        %1256 = vmatprep.subr.bf16.mxu0 0
        %1257 = vmatpush1.bf16.msra.mxu0 %v1240
        %1258 = vmatprep.subr.bf16.mxu0 0
        %1259 = vmatpush2.bf16.msra.mxu0 0
        %1260 = vmatprep.subr.bf16.mxu0 0
        %1261 = vmatpush2.bf16.msra.mxu0 0
        %1262 = vmatprep.subr.bf16.mxu0 0
        %1263 = vmatpush2.bf16.msra.mxu0 0
        %1264 = vmatprep.subr.bf16.mxu0 0
        %1265 = vmatpush2.bf16.msra.mxu0 0
        %1266 = vmatprep.subr.bf16.mxu0 0
        %1267 = vmatpush2.bf16.msra.mxu0 0
        %1268 = vmatprep.subr.bf16.mxu0 0
        %1269 = vmatpush2.bf16.msra.mxu0 0
        %1270 = vmatprep.subr.bf16.mxu0 0
        %1271 = vmatpush2.bf16.msra.mxu0 0
        %1272 = vmatprep.subr.bf16.mxu0 0
        %1273 = vmatpush2.bf16.msra.mxu0 0
        %1274 = vmatprep.mubr.bf16.mxu0 0
        %1275 = vmatmul.mubr.bf16.gmra.mxu0 %v1209
        %v1276 = vpop.f32.mrf.mxu0
        %v1277 = vadd.f32 0.0, %v1276
        %v1278 = vpop.f32.mrf.mxu0
        %v1279 = vpop.f32.mrf.mxu0
        %v1280 = vadd.f32 0.0, %v1279
        %v1281 = vpop.f32.mrf.mxu0
        %1282 = vmatprep.mubr.bf16.mxu0 0
        %1283 = vmatmul.mubr.bf16.gmra.mxu0 %v1212
        %v1284 = vpop.f32.mrf.mxu0
        %v1285 = vadd.f32 0.0, %v1284
        %v1286 = vpop.f32.mrf.mxu0
        %v1287 = vpop.f32.mrf.mxu0
        %v1288 = vadd.f32 0.0, %v1287
        %v1289 = vpop.f32.mrf.mxu0
        %1290 = vmatprep.mubr.bf16.mxu0 0
        %1291 = vmatmul.mubr.bf16.gmra.mxu0 %v1215
        %v1292 = vpop.f32.mrf.mxu0
        %v1293 = vadd.f32 0.0, %v1292
        %v1294 = vpop.f32.mrf.mxu0
        %v1295 = vpop.f32.mrf.mxu0
        %v1296 = vadd.f32 0.0, %v1295
        %v1297 = vpop.f32.mrf.mxu0
        %1298 = vmatprep.mubr.bf16.mxu0 0
        %1299 = vmatmul.mubr.bf16.gmra.mxu0 %v1218
        %v1300 = vpop.f32.mrf.mxu0
        %v1301 = vadd.f32 0.0, %v1300
        %v1302 = vpop.f32.mrf.mxu0
        %v1303 = vpop.f32.mrf.mxu0
        %v1304 = vadd.f32 0.0, %v1303
        %v1305 = vpop.f32.mrf.mxu0
        %1306 = vmatprep.mubr.bf16.mxu0 0
        %1307 = vmatmul.mubr.bf16.gmra.mxu0 %v1221
        %v1308 = vpop.f32.mrf.mxu0
        %v1309 = vadd.f32 0.0, %v1308
        %v1310 = vpop.f32.mrf.mxu0
        %v1311 = vpop.f32.mrf.mxu0
        %v1312 = vadd.f32 0.0, %v1311
        %v1313 = vpop.f32.mrf.mxu0
        %1314 = vmatprep.mubr.bf16.mxu0 0
        %1315 = vmatmul.mubr.bf16.gmra.mxu0 %v1224
        %v1316 = vpop.f32.mrf.mxu0
        %v1317 = vadd.f32 0.0, %v1316
        %v1318 = vpop.f32.mrf.mxu0
        %v1319 = vpop.f32.mrf.mxu0
        %v1320 = vadd.f32 0.0, %v1319
        %v1321 = vpop.f32.mrf.mxu0
        %1322 = vmatprep.mubr.bf16.mxu0 0
        %1323 = vmatmul.mubr.bf16.gmra.mxu0 %v1227
        %v1324 = vpop.f32.mrf.mxu0
        %v1325 = vadd.f32 0.0, %v1324
        %v1326 = vpop.f32.mrf.mxu0
        %v1327 = vpop.f32.mrf.mxu0
        %v1328 = vadd.f32 0.0, %v1327
        %v1329 = vpop.f32.mrf.mxu0
        %1330 = vmatprep.mubr.bf16.mxu0 0
        %1331 = vmatmul.mubr.bf16.gmra.mxu0 %v1230
        %v1332 = vpop.f32.mrf.mxu0
        %v1333 = vadd.f32 0.0, %v1332
        %v1334 = vpop.f32.mrf.mxu0
        %v1335 = vpop.f32.mrf.mxu0
        %v1336 = vadd.f32 0.0, %v1335
        %v1337 = vpop.f32.mrf.mxu0
        %1338 = vmatprep.mubr.bf16.mxu0 0
        %1339 = vmatmul.mubr.bf16.gmra.mxu0 %v1233
        %v1340 = vpop.f32.mrf.mxu0
        %v1341 = vadd.f32 0.0, %v1340
        %v1342 = vpop.f32.mrf.mxu0
        %v1343 = vpop.f32.mrf.mxu0
        %v1344 = vadd.f32 0.0, %v1343
        %v1345 = vpop.f32.mrf.mxu0
        %1346 = vmatprep.mubr.bf16.mxu0 0
        %1347 = vmatmul.mubr.bf16.gmra.mxu0 %v1236
        %v1348 = vpop.f32.mrf.mxu0
        %v1349 = vadd.f32 0.0, %v1348
        %v1350 = vpop.f32.mrf.mxu0
        %v1351 = vpop.f32.mrf.mxu0
        %v1352 = vadd.f32 0.0, %v1351
        %v1353 = vpop.f32.mrf.mxu0
        %1354 = vdwg.mxu0
        %v1356 = vsel %vm1207, %v1190, 0
        %v1359 = vsel %vm1207, %v1191, 0
        %v1362 = vsel %vm1207, %v1192, 0
        %v1365 = vsel %vm1207, %v1193, 0
        %v1368 = vsel %vm1207, %v1194, 0
        %v1371 = vsel %vm1207, %v1195, 0
        %v1374 = vsel %vm1207, %v1196, 0
        %v1377 = vsel %vm1207, %v1197, 0
        %v1380 = vsel %vm1207, %v1198, 0
        %v1383 = vsel %vm1207, %v1199, 0
        %1385 = vmatprep.subr.bf16.mxu0 0
        %1386 = vmatpush1.bf16.msra.mxu0 0
        %1387 = vmatprep.subr.bf16.mxu0 0
        %1388 = vmatpush1.bf16.msra.mxu0 0
        %1389 = vmatprep.subr.bf16.mxu0 0
        %1390 = vmatpush1.bf16.msra.mxu0 0
        %1391 = vmatprep.subr.bf16.mxu0 0
        %1392 = vmatpush1.bf16.msra.mxu0 0
        %1393 = vmatprep.subr.bf16.mxu0 0
        %1394 = vmatpush1.bf16.msra.mxu0 0
        %1395 = vmatprep.subr.bf16.mxu0 0
        %1396 = vmatpush1.bf16.msra.mxu0 0
        %1397 = vmatprep.subr.bf16.mxu0 0
        %1398 = vmatpush1.bf16.msra.mxu0 0
        %1399 = vmatprep.subr.bf16.mxu0 0
        %1400 = vmatpush1.bf16.msra.mxu0 %v1240
        %1401 = vmatprep.subr.bf16.mxu0 0
        %1402 = vmatpush2.bf16.msra.mxu0 0
        %1403 = vmatprep.subr.bf16.mxu0 0
        %1404 = vmatpush2.bf16.msra.mxu0 0
        %1405 = vmatprep.subr.bf16.mxu0 0
        %1406 = vmatpush2.bf16.msra.mxu0 0
        %1407 = vmatprep.subr.bf16.mxu0 0
        %1408 = vmatpush2.bf16.msra.mxu0 0
        %1409 = vmatprep.subr.bf16.mxu0 0
        %1410 = vmatpush2.bf16.msra.mxu0 0
        %1411 = vmatprep.subr.bf16.mxu0 0
        %1412 = vmatpush2.bf16.msra.mxu0 0
        %1413 = vmatprep.subr.bf16.mxu0 0
        %1414 = vmatpush2.bf16.msra.mxu0 0
        %1415 = vmatprep.subr.bf16.mxu0 0
        %1416 = vmatpush2.bf16.msra.mxu0 0
        %1417 = vmatprep.mubr.bf16.mxu0 0
        %1418 = vmatmul.mubr.bf16.gmra.mxu0 %v1356
        %v1419 = vpop.f32.mrf.mxu0
        %v1420 = vadd.f32 0.0, %v1419
        %v1421 = vpop.f32.mrf.mxu0
        %v1422 = vpop.f32.mrf.mxu0
        %v1423 = vadd.f32 0.0, %v1422
        %v1424 = vpop.f32.mrf.mxu0
        %1425 = vmatprep.mubr.bf16.mxu0 0
        %1426 = vmatmul.mubr.bf16.gmra.mxu0 %v1359
        %v1427 = vpop.f32.mrf.mxu0
        %v1428 = vadd.f32 0.0, %v1427
        %v1429 = vpop.f32.mrf.mxu0
        %v1430 = vpop.f32.mrf.mxu0
        %v1431 = vadd.f32 0.0, %v1430
        %v1432 = vpop.f32.mrf.mxu0
        %1433 = vmatprep.mubr.bf16.mxu0 0
        %1434 = vmatmul.mubr.bf16.gmra.mxu0 %v1362
        %v1435 = vpop.f32.mrf.mxu0
        %v1436 = vadd.f32 0.0, %v1435
        %v1437 = vpop.f32.mrf.mxu0
        %v1438 = vpop.f32.mrf.mxu0
        %v1439 = vadd.f32 0.0, %v1438
        %v1440 = vpop.f32.mrf.mxu0
        %1441 = vmatprep.mubr.bf16.mxu0 0
        %1442 = vmatmul.mubr.bf16.gmra.mxu0 %v1365
        %v1443 = vpop.f32.mrf.mxu0
        %v1444 = vadd.f32 0.0, %v1443
        %v1445 = vpop.f32.mrf.mxu0
        %v1446 = vpop.f32.mrf.mxu0
        %v1447 = vadd.f32 0.0, %v1446
        %v1448 = vpop.f32.mrf.mxu0
        %1449 = vmatprep.mubr.bf16.mxu0 0
        %1450 = vmatmul.mubr.bf16.gmra.mxu0 %v1368
        %v1451 = vpop.f32.mrf.mxu0
        %v1452 = vadd.f32 0.0, %v1451
        %v1453 = vpop.f32.mrf.mxu0
        %v1454 = vpop.f32.mrf.mxu0
        %v1455 = vadd.f32 0.0, %v1454
        %v1456 = vpop.f32.mrf.mxu0
        %1457 = vmatprep.mubr.bf16.mxu0 0
        %1458 = vmatmul.mubr.bf16.gmra.mxu0 %v1371
        %v1459 = vpop.f32.mrf.mxu0
        %v1460 = vadd.f32 0.0, %v1459
        %v1461 = vpop.f32.mrf.mxu0
        %v1462 = vpop.f32.mrf.mxu0
        %v1463 = vadd.f32 0.0, %v1462
        %v1464 = vpop.f32.mrf.mxu0
        %1465 = vmatprep.mubr.bf16.mxu0 0
        %1466 = vmatmul.mubr.bf16.gmra.mxu0 %v1374
        %v1467 = vpop.f32.mrf.mxu0
        %v1468 = vadd.f32 0.0, %v1467
        %v1469 = vpop.f32.mrf.mxu0
        %v1470 = vpop.f32.mrf.mxu0
        %v1471 = vadd.f32 0.0, %v1470
        %v1472 = vpop.f32.mrf.mxu0
        %1473 = vmatprep.mubr.bf16.mxu0 0
        %1474 = vmatmul.mubr.bf16.gmra.mxu0 %v1377
        %v1475 = vpop.f32.mrf.mxu0
        %v1476 = vadd.f32 0.0, %v1475
        %v1477 = vpop.f32.mrf.mxu0
        %v1478 = vpop.f32.mrf.mxu0
        %v1479 = vadd.f32 0.0, %v1478
        %v1480 = vpop.f32.mrf.mxu0
        %1481 = vmatprep.mubr.bf16.mxu0 0
        %1482 = vmatmul.mubr.bf16.gmra.mxu0 %v1380
        %v1483 = vpop.f32.mrf.mxu0
        %v1484 = vadd.f32 0.0, %v1483
        %v1485 = vpop.f32.mrf.mxu0
        %v1486 = vpop.f32.mrf.mxu0
        %v1487 = vadd.f32 0.0, %v1486
        %v1488 = vpop.f32.mrf.mxu0
        %1489 = vmatprep.mubr.bf16.mxu0 0
        %1490 = vmatmul.mubr.bf16.gmra.mxu0 %v1383
        %v1491 = vpop.f32.mrf.mxu0
        %v1492 = vadd.f32 0.0, %v1491
        %v1493 = vpop.f32.mrf.mxu0
        %v1494 = vpop.f32.mrf.mxu0
        %v1495 = vadd.f32 0.0, %v1494
        %v1496 = vpop.f32.mrf.mxu0
        %1497 = vdwg.mxu0
        %v1498 = vld [vmem:[%s4] sm:$0x1]
        %1515 = vrot.lane.b32.xlu0 %v1285, 124
        %v1516 = vpop.permute.xlu0 %1515
        %1517 = vrot.lane.b32.xlu0 %v1288, 124
        %v1518 = vpop.permute.xlu0 %1517
        %1519 = vrot.lane.b32.xlu0 %v1293, 124
        %v1520 = vpop.permute.xlu0 %1519
        %1521 = vrot.lane.b32.xlu0 %v1296, 124
        %v1522 = vpop.permute.xlu0 %1521
        %1523 = vrot.lane.b32.xlu0 %v1301, 124
        %v1524 = vpop.permute.xlu0 %1523
        %1525 = vrot.lane.b32.xlu0 %v1304, 124
        %v1526 = vpop.permute.xlu0 %1525
        %1527 = vrot.lane.b32.xlu0 %v1309, 124
        %v1528 = vpop.permute.xlu0 %1527
        %1529 = vrot.lane.b32.xlu0 %v1312, 124
        %v1530 = vpop.permute.xlu0 %1529
        %1531 = vrot.lane.b32.xlu0 %v1317, 124
        %v1532 = vpop.permute.xlu0 %1531
        %1533 = vrot.lane.b32.xlu0 %v1320, 124
        %v1534 = vpop.permute.xlu0 %1533
        %1535 = vrot.lane.b32.xlu0 %v1325, 124
        %v1536 = vpop.permute.xlu0 %1535
        %1537 = vrot.lane.b32.xlu0 %v1328, 124
        %v1538 = vpop.permute.xlu0 %1537
        %1539 = vrot.lane.b32.xlu0 %v1333, 124
        %v1540 = vpop.permute.xlu0 %1539
        %1541 = vrot.lane.b32.xlu0 %v1336, 124
        %v1542 = vpop.permute.xlu0 %1541
        %1543 = vrot.lane.b32.xlu0 %v1341, 124
        %v1544 = vpop.permute.xlu0 %1543
        %1545 = vrot.lane.b32.xlu0 %v1344, 124
        %v1546 = vpop.permute.xlu0 %1545
        %v1563 = vadd.f32 %v1277, %v1516
        %v1564 = vadd.f32 %v1280, %v1518
        %v1565 = vadd.f32 %v1285, %v1520
        %v1566 = vadd.f32 %v1288, %v1522
        %v1567 = vadd.f32 %v1293, %v1524
        %v1568 = vadd.f32 %v1296, %v1526
        %v1569 = vadd.f32 %v1301, %v1528
        %v1570 = vadd.f32 %v1304, %v1530
        %v1571 = vadd.f32 %v1309, %v1532
        %v1572 = vadd.f32 %v1312, %v1534
        %v1573 = vadd.f32 %v1317, %v1536
        %v1574 = vadd.f32 %v1320, %v1538
        %v1575 = vadd.f32 %v1325, %v1540
        %v1576 = vadd.f32 %v1328, %v1542
        %v1577 = vadd.f32 %v1333, %v1544
        %v1578 = vadd.f32 %v1336, %v1546
        %1581 = vrot.lane.b32.xlu0 %v1293, 120
        %v1582 = vpop.permute.xlu0 %1581
        %1583 = vrot.lane.b32.xlu0 %v1296, 120
        %v1584 = vpop.permute.xlu0 %1583
        %1585 = vrot.lane.b32.xlu0 %v1301, 120
        %v1586 = vpop.permute.xlu0 %1585
        %1587 = vrot.lane.b32.xlu0 %v1304, 120
        %v1588 = vpop.permute.xlu0 %1587
        %1589 = vrot.lane.b32.xlu0 %v1309, 120
        %v1590 = vpop.permute.xlu0 %1589
        %1591 = vrot.lane.b32.xlu0 %v1312, 120
        %v1592 = vpop.permute.xlu0 %1591
        %1593 = vrot.lane.b32.xlu0 %v1317, 120
        %v1594 = vpop.permute.xlu0 %1593
        %1595 = vrot.lane.b32.xlu0 %v1320, 120
        %v1596 = vpop.permute.xlu0 %1595
        %1597 = vrot.lane.b32.xlu0 %v1325, 120
        %v1598 = vpop.permute.xlu0 %1597
        %1599 = vrot.lane.b32.xlu0 %v1328, 120
        %v1600 = vpop.permute.xlu0 %1599
        %1601 = vrot.lane.b32.xlu0 %v1333, 120
        %v1602 = vpop.permute.xlu0 %1601
        %1603 = vrot.lane.b32.xlu0 %v1336, 120
        %v1604 = vpop.permute.xlu0 %1603
        %1605 = vrot.lane.b32.xlu0 %v1341, 120
        %v1606 = vpop.permute.xlu0 %1605
        %1607 = vrot.lane.b32.xlu0 %v1344, 120
        %v1608 = vpop.permute.xlu0 %1607
        %1609 = vrot.lane.b32.xlu0 %v1349, 120
        %v1610 = vpop.permute.xlu0 %1609
        %1611 = vrot.lane.b32.xlu0 %v1352, 120
        %v1612 = vpop.permute.xlu0 %1611
        %v1629 = vadd.f32 %v1563, %v1582
        %v1630 = vadd.f32 %v1564, %v1584
        %v1631 = vadd.f32 %v1565, %v1586
        %v1632 = vadd.f32 %v1566, %v1588
        %v1633 = vadd.f32 %v1567, %v1590
        %v1634 = vadd.f32 %v1568, %v1592
        %v1635 = vadd.f32 %v1569, %v1594
        %v1636 = vadd.f32 %v1570, %v1596
        %v1637 = vadd.f32 %v1571, %v1598
        %v1638 = vadd.f32 %v1572, %v1600
        %v1639 = vadd.f32 %v1573, %v1602
        %v1640 = vadd.f32 %v1574, %v1604
        %v1641 = vadd.f32 %v1575, %v1606
        %v1642 = vadd.f32 %v1576, %v1608
        %v1643 = vadd.f32 %v1577, %v1610
        %v1644 = vadd.f32 %v1578, %v1612
        %v1646 = vlaneseq
        %v1647 = vshrl.u32 %v1646, 7
        %v1648 = vsub.s32 0, %v1647
        %v1649 = vrot.slane %v1498, %v1648
        %v1651 = vadd.f32 %v1629, %v1649
        %v1652 = vadd.f32 %v1630, %v1649
        %v1653 = vadd.f32 %v1631, %v1649
        %v1654 = vadd.f32 %v1632, %v1649
        %v1655 = vadd.f32 %v1633, %v1649
        %v1656 = vadd.f32 %v1634, %v1649
        %v1657 = vadd.f32 %v1635, %v1649
        %v1658 = vadd.f32 %v1636, %v1649
        %v1659 = vadd.f32 %v1637, %v1649
        %v1660 = vadd.f32 %v1638, %v1649
        %v1661 = vadd.f32 %v1639, %v1649
        %v1662 = vadd.f32 %v1640, %v1649
        %v1663 = vadd.f32 %v1641, %v1649
        %v1664 = vadd.f32 %v1642, %v1649
        %v1665 = vadd.f32 %v1643, %v1649
        %v1666 = vadd.f32 %v1644, %v1649
        %1683 = vrot.lane.b32.xlu0 %v1428, 124
        %v1684 = vpop.permute.xlu0 %1683
        %1685 = vrot.lane.b32.xlu0 %v1431, 124
        %v1686 = vpop.permute.xlu0 %1685
        %1687 = vrot.lane.b32.xlu0 %v1436, 124
        %v1688 = vpop.permute.xlu0 %1687
        %1689 = vrot.lane.b32.xlu0 %v1439, 124
        %v1690 = vpop.permute.xlu0 %1689
        %1691 = vrot.lane.b32.xlu0 %v1444, 124
        %v1692 = vpop.permute.xlu0 %1691
        %1693 = vrot.lane.b32.xlu0 %v1447, 124
        %v1694 = vpop.permute.xlu0 %1693
        %1695 = vrot.lane.b32.xlu0 %v1452, 124
        %v1696 = vpop.permute.xlu0 %1695
        %1697 = vrot.lane.b32.xlu0 %v1455, 124
        %v1698 = vpop.permute.xlu0 %1697
        %1699 = vrot.lane.b32.xlu0 %v1460, 124
        %v1700 = vpop.permute.xlu0 %1699
        %1701 = vrot.lane.b32.xlu0 %v1463, 124
        %v1702 = vpop.permute.xlu0 %1701
        %1703 = vrot.lane.b32.xlu0 %v1468, 124
        %v1704 = vpop.permute.xlu0 %1703
        %1705 = vrot.lane.b32.xlu0 %v1471, 124
        %v1706 = vpop.permute.xlu0 %1705
        %1707 = vrot.lane.b32.xlu0 %v1476, 124
        %v1708 = vpop.permute.xlu0 %1707
        %1709 = vrot.lane.b32.xlu0 %v1479, 124
        %v1710 = vpop.permute.xlu0 %1709
        %1711 = vrot.lane.b32.xlu0 %v1484, 124
        %v1712 = vpop.permute.xlu0 %1711
        %1713 = vrot.lane.b32.xlu0 %v1487, 124
        %v1714 = vpop.permute.xlu0 %1713
        %v1731 = vadd.f32 %v1420, %v1684
        %v1732 = vadd.f32 %v1423, %v1686
        %v1733 = vadd.f32 %v1428, %v1688
        %v1734 = vadd.f32 %v1431, %v1690
        %v1735 = vadd.f32 %v1436, %v1692
        %v1736 = vadd.f32 %v1439, %v1694
        %v1737 = vadd.f32 %v1444, %v1696
        %v1738 = vadd.f32 %v1447, %v1698
        %v1739 = vadd.f32 %v1452, %v1700
        %v1740 = vadd.f32 %v1455, %v1702
        %v1741 = vadd.f32 %v1460, %v1704
        %v1742 = vadd.f32 %v1463, %v1706
        %v1743 = vadd.f32 %v1468, %v1708
        %v1744 = vadd.f32 %v1471, %v1710
        %v1745 = vadd.f32 %v1476, %v1712
        %v1746 = vadd.f32 %v1479, %v1714
        %1749 = vrot.lane.b32.xlu0 %v1436, 120
        %v1750 = vpop.permute.xlu0 %1749
        %1751 = vrot.lane.b32.xlu0 %v1439, 120
        %v1752 = vpop.permute.xlu0 %1751
        %1753 = vrot.lane.b32.xlu0 %v1444, 120
        %v1754 = vpop.permute.xlu0 %1753
        %1755 = vrot.lane.b32.xlu0 %v1447, 120
        %v1756 = vpop.permute.xlu0 %1755
        %1757 = vrot.lane.b32.xlu0 %v1452, 120
        %v1758 = vpop.permute.xlu0 %1757
        %1759 = vrot.lane.b32.xlu0 %v1455, 120
        %v1760 = vpop.permute.xlu0 %1759
        %1761 = vrot.lane.b32.xlu0 %v1460, 120
        %v1762 = vpop.permute.xlu0 %1761
        %1763 = vrot.lane.b32.xlu0 %v1463, 120
        %v1764 = vpop.permute.xlu0 %1763
        %1765 = vrot.lane.b32.xlu0 %v1468, 120
        %v1766 = vpop.permute.xlu0 %1765
        %1767 = vrot.lane.b32.xlu0 %v1471, 120
        %v1768 = vpop.permute.xlu0 %1767
        %1769 = vrot.lane.b32.xlu0 %v1476, 120
        %v1770 = vpop.permute.xlu0 %1769
        %1771 = vrot.lane.b32.xlu0 %v1479, 120
        %v1772 = vpop.permute.xlu0 %1771
        %1773 = vrot.lane.b32.xlu0 %v1484, 120
        %v1774 = vpop.permute.xlu0 %1773
        %1775 = vrot.lane.b32.xlu0 %v1487, 120
        %v1776 = vpop.permute.xlu0 %1775
        %1777 = vrot.lane.b32.xlu0 %v1492, 120
        %v1778 = vpop.permute.xlu0 %1777
        %1779 = vrot.lane.b32.xlu0 %v1495, 120
        %v1780 = vpop.permute.xlu0 %1779
        %v1797 = vadd.f32 %v1731, %v1750
        %v1798 = vadd.f32 %v1732, %v1752
        %v1799 = vadd.f32 %v1733, %v1754
        %v1800 = vadd.f32 %v1734, %v1756
        %v1801 = vadd.f32 %v1735, %v1758
        %v1802 = vadd.f32 %v1736, %v1760
        %v1803 = vadd.f32 %v1737, %v1762
        %v1804 = vadd.f32 %v1738, %v1764
        %v1805 = vadd.f32 %v1739, %v1766
        %v1806 = vadd.f32 %v1740, %v1768
        %v1807 = vadd.f32 %v1741, %v1770
        %v1808 = vadd.f32 %v1742, %v1772
        %v1809 = vadd.f32 %v1743, %v1774
        %v1810 = vadd.f32 %v1744, %v1776
        %v1811 = vadd.f32 %v1745, %v1778
        %v1812 = vadd.f32 %v1746, %v1780
        %v1813 = vadd.f32 %v1797, %v1649
        %v1814 = vadd.f32 %v1798, %v1649
        %v1815 = vadd.f32 %v1799, %v1649
        %v1816 = vadd.f32 %v1800, %v1649
        %v1817 = vadd.f32 %v1801, %v1649
        %v1818 = vadd.f32 %v1802, %v1649
        %v1819 = vadd.f32 %v1803, %v1649
        %v1820 = vadd.f32 %v1804, %v1649
        %v1821 = vadd.f32 %v1805, %v1649
        %v1822 = vadd.f32 %v1806, %v1649
        %v1823 = vadd.f32 %v1807, %v1649
        %v1824 = vadd.f32 %v1808, %v1649
        %v1825 = vadd.f32 %v1809, %v1649
        %v1826 = vadd.f32 %v1810, %v1649
        %v1827 = vadd.f32 %v1811, %v1649
        %v1828 = vadd.f32 %v1812, %v1649
        %v1829 = vpack.c.bf16 %v1652, %v1651
        %v1830 = vpack.c.bf16 %v1654, %v1653
        %v1831 = vpack.c.bf16 %v1656, %v1655
        %v1832 = vpack.c.bf16 %v1658, %v1657
        %v1833 = vpack.c.bf16 %v1660, %v1659
        %v1834 = vpack.c.bf16 %v1662, %v1661
        %v1835 = vpack.c.bf16 %v1664, %v1663
        %v1836 = vpack.c.bf16 %v1666, %v1665
        %v1845 = vunpack.c.l.b16 %v1829
        %v1846 = vunpack.c.h.b16 %v1829
        %v1847 = vunpack.c.l.b16 %v1830
        %v1848 = vunpack.c.h.b16 %v1830
        %v1849 = vunpack.c.l.b16 %v1831
        %v1850 = vunpack.c.h.b16 %v1831
        %v1851 = vunpack.c.l.b16 %v1832
        %v1852 = vunpack.c.h.b16 %v1832
        %v1853 = vunpack.c.l.b16 %v1833
        %v1854 = vunpack.c.h.b16 %v1833
        %v1855 = vunpack.c.l.b16 %v1834
        %v1856 = vunpack.c.h.b16 %v1834
        %v1857 = vunpack.c.l.b16 %v1835
        %v1858 = vunpack.c.h.b16 %v1835
        %v1859 = vunpack.c.l.b16 %v1836
        %v1860 = vunpack.c.h.b16 %v1836
        %v1861 = vpack.c.b16 %v1845, %v1845
        %v1862 = vpack.c.b16 %v1846, %v1846
        %v1863 = vpack.c.b16 %v1847, %v1847
        %v1864 = vpack.c.b16 %v1848, %v1848
        %v1865 = vpack.c.b16 %v1849, %v1849
        %v1866 = vpack.c.b16 %v1850, %v1850
        %v1867 = vpack.c.b16 %v1851, %v1851
        %v1868 = vpack.c.b16 %v1852, %v1852
        %v1869 = vpack.c.b16 %v1853, %v1853
        %v1870 = vpack.c.b16 %v1854, %v1854
        %v1871 = vpack.c.b16 %v1855, %v1855
        %v1872 = vpack.c.b16 %v1856, %v1856
        %v1873 = vpack.c.b16 %v1857, %v1857
        %v1874 = vpack.c.b16 %v1858, %v1858
        %v1875 = vpack.c.b16 %v1859, %v1859
        %v1876 = vpack.c.b16 %v1860, %v1860
        %vm1893 = vcmask 27648
        %1894 = vst.msk [vmem:[%s330] sm:$0xf] %vm1893, %v1861
        %1895 = vst.msk [vmem:[%s330 + $0x4] sm:$0xf] %vm1893, %v1862
        %1896 = vst.msk [vmem:[%s330 + $0x8] sm:$0xf] %vm1893, %v1863
        %1897 = vst.msk [vmem:[%s330 + $0xc] sm:$0xf] %vm1893, %v1864
        %1898 = vst.msk [vmem:[%s330 + $0x10] sm:$0xf] %vm1893, %v1865
        %1899 = vst.msk [vmem:[%s330 + $0x14] sm:$0xf] %vm1893, %v1866
        %1900 = vst.msk [vmem:[%s330 + $0x18] sm:$0xf] %vm1893, %v1867
        %1901 = vst.msk [vmem:[%s330 + $0x1c] sm:$0xf] %vm1893, %v1868
        %1902 = vst.msk [vmem:[%s330 + $0x20] sm:$0xf] %vm1893, %v1869
        %1903 = vst.msk [vmem:[%s330 + $0x24] sm:$0xf] %vm1893, %v1870
        %1904 = vst.msk [vmem:[%s330 + $0x28] sm:$0xf] %vm1893, %v1871
        %1905 = vst.msk [vmem:[%s330 + $0x2c] sm:$0xf] %vm1893, %v1872
        %1906 = vst.msk [vmem:[%s330 + $0x30] sm:$0xf] %vm1893, %v1873
        %1907 = vst.msk [vmem:[%s330 + $0x34] sm:$0xf] %vm1893, %v1874
        %1908 = vst.msk [vmem:[%s330 + $0x38] sm:$0xf] %vm1893, %v1875
        %1909 = vst.msk [vmem:[%s330 + $0x3c] sm:$0xf] %vm1893, %v1876
        %v1910 = vpack.c.bf16 %v1814, %v1813
        %v1911 = vpack.c.bf16 %v1816, %v1815
        %v1912 = vpack.c.bf16 %v1818, %v1817
        %v1913 = vpack.c.bf16 %v1820, %v1819
        %v1914 = vpack.c.bf16 %v1822, %v1821
        %v1915 = vpack.c.bf16 %v1824, %v1823
        %v1916 = vpack.c.bf16 %v1826, %v1825
        %v1917 = vpack.c.bf16 %v1828, %v1827
        %v1926 = vunpack.c.l.b16 %v1910
        %v1927 = vunpack.c.h.b16 %v1910
        %v1928 = vunpack.c.l.b16 %v1911
        %v1929 = vunpack.c.h.b16 %v1911
        %v1930 = vunpack.c.l.b16 %v1912
        %v1931 = vunpack.c.h.b16 %v1912
        %v1932 = vunpack.c.l.b16 %v1913
        %v1933 = vunpack.c.h.b16 %v1913
        %v1934 = vunpack.c.l.b16 %v1914
        %v1935 = vunpack.c.h.b16 %v1914
        %v1936 = vunpack.c.l.b16 %v1915
        %v1937 = vunpack.c.h.b16 %v1915
        %v1938 = vunpack.c.l.b16 %v1916
        %v1939 = vunpack.c.h.b16 %v1916
        %v1940 = vunpack.c.l.b16 %v1917
        %v1941 = vunpack.c.h.b16 %v1917
        %v1942 = vpack.c.b16 %v1926, %v1926
        %v1943 = vpack.c.b16 %v1927, %v1927
        %v1944 = vpack.c.b16 %v1928, %v1928
        %v1945 = vpack.c.b16 %v1929, %v1929
        %v1946 = vpack.c.b16 %v1930, %v1930
        %v1947 = vpack.c.b16 %v1931, %v1931
        %v1948 = vpack.c.b16 %v1932, %v1932
        %v1949 = vpack.c.b16 %v1933, %v1933
        %v1950 = vpack.c.b16 %v1934, %v1934
        %v1951 = vpack.c.b16 %v1935, %v1935
        %v1952 = vpack.c.b16 %v1936, %v1936
        %v1953 = vpack.c.b16 %v1937, %v1937
        %v1954 = vpack.c.b16 %v1938, %v1938
        %v1955 = vpack.c.b16 %v1939, %v1939
        %v1956 = vpack.c.b16 %v1940, %v1940
        %v1957 = vpack.c.b16 %v1941, %v1941
        %s1974 = scalar_lea.vmem %s330, 64 [#allocation2]
        %1975 = vst.msk [vmem:[%s1974] sm:$0xf] %vm1893, %v1942
        %1976 = vst.msk [vmem:[%s1974 + $0x4] sm:$0xf] %vm1893, %v1943
        %1977 = vst.msk [vmem:[%s1974 + $0x8] sm:$0xf] %vm1893, %v1944
        %1978 = vst.msk [vmem:[%s1974 + $0xc] sm:$0xf] %vm1893, %v1945
        %1979 = vst.msk [vmem:[%s1974 + $0x10] sm:$0xf] %vm1893, %v1946
        %1980 = vst.msk [vmem:[%s1974 + $0x14] sm:$0xf] %vm1893, %v1947
        %1981 = vst.msk [vmem:[%s1974 + $0x18] sm:$0xf] %vm1893, %v1948
        %1982 = vst.msk [vmem:[%s1974 + $0x1c] sm:$0xf] %vm1893, %v1949
        %1983 = vst.msk [vmem:[%s1974 + $0x20] sm:$0xf] %vm1893, %v1950
        %1984 = vst.msk [vmem:[%s1974 + $0x24] sm:$0xf] %vm1893, %v1951
        %1985 = vst.msk [vmem:[%s1974 + $0x28] sm:$0xf] %vm1893, %v1952
        %1986 = vst.msk [vmem:[%s1974 + $0x2c] sm:$0xf] %vm1893, %v1953
        %1987 = vst.msk [vmem:[%s1974 + $0x30] sm:$0xf] %vm1893, %v1954
        %1988 = vst.msk [vmem:[%s1974 + $0x34] sm:$0xf] %vm1893, %v1955
        %1989 = vst.msk [vmem:[%s1974 + $0x38] sm:$0xf] %vm1893, %v1956
        %1990 = vst.msk [vmem:[%s1974 + $0x3c] sm:$0xf] %vm1893, %v1957
        %s1991 = sand.u32 %s180, 1
        %s1992 = sand.u32 %s180, 1
        %s1993 = smul.addr %s1992, 128
        %s1994 = scalar_lea.vmem [#allocation2], %s1993
        // Predicated region
        $region41: #{tpu_custom_call.1} parent=39 // pred_check
          %p1995 = pneg %p190
        $region42: #{tpu_custom_call.1} parent=39 // pred_check_branch
          %1997 = sbr.rel (%p1995) target = $region44
        $region43: #{tpu_custom_call.1} parent=39 // pred_region
          %s1998 = smul.u32 16, %s21
          %s1999 = smul.addr %s20, 128
          %s2000 = sadd.s32 %s1998, %s1999
          %s2001 = smul.addr %s2000, 4
          %s2002 = scalar_lea.vmem %s5, %s2001
          // Predicated region
          $region45: #{tpu_custom_call.1} parent=43 // pred_check
            _
          $region46: #{tpu_custom_call.1} parent=43 // pred_check_branch
            %2004 = sbr.rel (0) target = $region48
          $region47: #{tpu_custom_call.1} parent=43 // pred_region
            // Predicated region
            $region49: #{tpu_custom_call.1} parent=47 // pred_check
              _
            $region50: #{tpu_custom_call.1} parent=47 // pred_check_branch
              %2006 = sbr.rel target = $region52
            $region51: #{tpu_custom_call.1} parent=47 // pred_region
              // Predicated region
              $region64: #{tpu_custom_call.1} parent=51 // pred_check
                _
              $region65: #{tpu_custom_call.1} parent=51 // pred_check_branch
                %2084 = sbr.rel (0) target = $region67
              $region66: #{tpu_custom_call.1} parent=51 // pred_region
                loop: start=0, step=1, limit=1
                $region68: #{tpu_custom_call.1} parent=66 // loop_pre_header
                  _
                $region69: #{tpu_custom_call.1} parent=66 // loop_header
                  %s2086 = sphi 0, %s2090
                  %p2087 = scmp.ge.s32.totalorder %s2086, 1
                  %s2091 = sphi %s1994, %s1994
                  %s2092 = sphi %s2002, %s2002
                $region70: #{tpu_custom_call.1} parent=66 // loop_header_branch
                  %2089 = sbr.rel (%p2087) target = $region74
                $region71: #{tpu_custom_call.1} parent=66 // loop_body
                  _
                $region72: #{tpu_custom_call.1} parent=66 // loop_footer
                  %s2090 = sadd.s32 1, %s2086
                $region73: #{tpu_custom_call.1} parent=66 // loop_footer_branch
                  %2085 = sbr.rel target = $region69
                $region74: #{tpu_custom_call.1} parent=66 // loop_exit
                  _
                %s2094 = ssub.s32 16, 1
                loop: start=0, step=1, limit=1
                $region75: #{tpu_custom_call.1} parent=66 // loop_pre_header
                  _
                $region76: #{tpu_custom_call.1} parent=66 // loop_header
                  %s2096 = sphi 0, %s2100
                  %p2097 = scmp.ge.s32.totalorder %s2096, 1
                  %s2101 = sphi %s1994, %s1994
                  %s2102 = sphi %s2002, %s2002
                $region77: #{tpu_custom_call.1} parent=66 // loop_header_branch
                  %2099 = sbr.rel (%p2097) target = $region81
                $region78: #{tpu_custom_call.1} parent=66 // loop_body
                  %v2103 = vld [vmem:[%s2101] sm:%s2094]
                  %2104 = vst [vmem:[%s2102] sm:%s2094] %v2103
                  %v2105 = vld [vmem:[%s2101 + $0x4] sm:%s2094]
                  %2106 = vst [vmem:[%s2102 + $0x4] sm:%s2094] %v2105
                  %v2107 = vld [vmem:[%s2101 + $0x8] sm:%s2094]
                  %2108 = vst [vmem:[%s2102 + $0x8] sm:%s2094] %v2107
                  %v2109 = vld [vmem:[%s2101 + $0xc] sm:%s2094]
                  %2110 = vst [vmem:[%s2102 + $0xc] sm:%s2094] %v2109
                  %v2111 = vld [vmem:[%s2101 + $0x10] sm:%s2094]
                  %2112 = vst [vmem:[%s2102 + $0x10] sm:%s2094] %v2111
                  %v2113 = vld [vmem:[%s2101 + $0x14] sm:%s2094]
                  %2114 = vst [vmem:[%s2102 + $0x14] sm:%s2094] %v2113
                  %v2115 = vld [vmem:[%s2101 + $0x18] sm:%s2094]
                  %2116 = vst [vmem:[%s2102 + $0x18] sm:%s2094] %v2115
                  %v2117 = vld [vmem:[%s2101 + $0x1c] sm:%s2094]
                  %2118 = vst [vmem:[%s2102 + $0x1c] sm:%s2094] %v2117
                  %v2119 = vld [vmem:[%s2101 + $0x20] sm:%s2094]
                  %2120 = vst [vmem:[%s2102 + $0x20] sm:%s2094] %v2119
                  %v2121 = vld [vmem:[%s2101 + $0x24] sm:%s2094]
                  %2122 = vst [vmem:[%s2102 + $0x24] sm:%s2094] %v2121
                  %v2123 = vld [vmem:[%s2101 + $0x28] sm:%s2094]
                  %2124 = vst [vmem:[%s2102 + $0x28] sm:%s2094] %v2123
                  %v2125 = vld [vmem:[%s2101 + $0x2c] sm:%s2094]
                  %2126 = vst [vmem:[%s2102 + $0x2c] sm:%s2094] %v2125
                  %v2127 = vld [vmem:[%s2101 + $0x30] sm:%s2094]
                  %2128 = vst [vmem:[%s2102 + $0x30] sm:%s2094] %v2127
                  %v2129 = vld [vmem:[%s2101 + $0x34] sm:%s2094]
                  %2130 = vst [vmem:[%s2102 + $0x34] sm:%s2094] %v2129
                  %v2131 = vld [vmem:[%s2101 + $0x38] sm:%s2094]
                  %2132 = vst [vmem:[%s2102 + $0x38] sm:%s2094] %v2131
                  %v2133 = vld [vmem:[%s2101 + $0x3c] sm:%s2094]
                  %2134 = vst [vmem:[%s2102 + $0x3c] sm:%s2094] %v2133
                  %v2135 = vld [vmem:[%s2101 + $0x40] sm:%s2094]
                  %2136 = vst [vmem:[%s2102 + $0x100] sm:%s2094] %v2135
                  %v2137 = vld [vmem:[%s2101 + $0x44] sm:%s2094]
                  %2138 = vst [vmem:[%s2102 + $0x104] sm:%s2094] %v2137
                  %v2139 = vld [vmem:[%s2101 + $0x48] sm:%s2094]
                  %2140 = vst [vmem:[%s2102 + $0x108] sm:%s2094] %v2139
                  %v2141 = vld [vmem:[%s2101 + $0x4c] sm:%s2094]
                  %2142 = vst [vmem:[%s2102 + $0x10c] sm:%s2094] %v2141
                  %v2143 = vld [vmem:[%s2101 + $0x50] sm:%s2094]
                  %2144 = vst [vmem:[%s2102 + $0x110] sm:%s2094] %v2143
                  %v2145 = vld [vmem:[%s2101 + $0x54] sm:%s2094]
                  %2146 = vst [vmem:[%s2102 + $0x114] sm:%s2094] %v2145
                  %v2147 = vld [vmem:[%s2101 + $0x58] sm:%s2094]
                  %2148 = vst [vmem:[%s2102 + $0x118] sm:%s2094] %v2147
                  %v2149 = vld [vmem:[%s2101 + $0x5c] sm:%s2094]
                  %2150 = vst [vmem:[%s2102 + $0x11c] sm:%s2094] %v2149
                  %v2151 = vld [vmem:[%s2101 + $0x60] sm:%s2094]
                  %2152 = vst [vmem:[%s2102 + $0x120] sm:%s2094] %v2151
                  %v2153 = vld [vmem:[%s2101 + $0x64] sm:%s2094]
                  %2154 = vst [vmem:[%s2102 + $0x124] sm:%s2094] %v2153
                  %v2155 = vld [vmem:[%s2101 + $0x68] sm:%s2094]
                  %2156 = vst [vmem:[%s2102 + $0x128] sm:%s2094] %v2155
                  %v2157 = vld [vmem:[%s2101 + $0x6c] sm:%s2094]
                  %2158 = vst [vmem:[%s2102 + $0x12c] sm:%s2094] %v2157
                  %v2159 = vld [vmem:[%s2101 + $0x70] sm:%s2094]
                  %2160 = vst [vmem:[%s2102 + $0x130] sm:%s2094] %v2159
                  %v2161 = vld [vmem:[%s2101 + $0x74] sm:%s2094]
                  %2162 = vst [vmem:[%s2102 + $0x134] sm:%s2094] %v2161
                  %v2163 = vld [vmem:[%s2101 + $0x78] sm:%s2094]
                  %2164 = vst [vmem:[%s2102 + $0x138] sm:%s2094] %v2163
                  %v2165 = vld [vmem:[%s2101 + $0x7c] sm:%s2094]
                  %2166 = vst [vmem:[%s2102 + $0x13c] sm:%s2094] %v2165
                $region79: #{tpu_custom_call.1} parent=66 // loop_footer
                  %s2100 = sadd.s32 1, %s2096
                $region80: #{tpu_custom_call.1} parent=66 // loop_footer_branch
                  %2095 = sbr.rel target = $region76
                $region81: #{tpu_custom_call.1} parent=66 // loop_exit
                  _
              $region67: #{tpu_custom_call.1} parent=51 // pred_fallthru
                _
            $region52: #{tpu_custom_call.1} parent=47 // pred_fallthru
              _
            // Predicated region
            $region53: #{tpu_custom_call.1} parent=47 // pred_check
              _
            $region54: #{tpu_custom_call.1} parent=47 // pred_check_branch
              %2008 = sbr.rel (0) target = $region56
            $region55: #{tpu_custom_call.1} parent=47 // pred_region
              %s2010 = ssub.s32 16, 1
              loop: start=0, step=1, limit=1
              $region57: #{tpu_custom_call.1} parent=55 // loop_pre_header
                _
              $region58: #{tpu_custom_call.1} parent=55 // loop_header
                %s2012 = sphi 0, %s2016
                %p2013 = scmp.ge.s32.totalorder %s2012, 1
                %s2017 = sphi %s1994, %s1994
                %s2018 = sphi %s2002, %s2002
              $region59: #{tpu_custom_call.1} parent=55 // loop_header_branch
                %2015 = sbr.rel (%p2013) target = $region63
              $region60: #{tpu_custom_call.1} parent=55 // loop_body
                %v2019 = vld [vmem:[%s2017] sm:%s2010]
                %2020 = vst [vmem:[%s2018] sm:%s2010] %v2019
                %v2021 = vld [vmem:[%s2017 + $0x4] sm:%s2010]
                %2022 = vst [vmem:[%s2018 + $0x4] sm:%s2010] %v2021
                %v2023 = vld [vmem:[%s2017 + $0x8] sm:%s2010]
                %2024 = vst [vmem:[%s2018 + $0x8] sm:%s2010] %v2023
                %v2025 = vld [vmem:[%s2017 + $0xc] sm:%s2010]
                %2026 = vst [vmem:[%s2018 + $0xc] sm:%s2010] %v2025
                %v2027 = vld [vmem:[%s2017 + $0x10] sm:%s2010]
                %2028 = vst [vmem:[%s2018 + $0x10] sm:%s2010] %v2027
                %v2029 = vld [vmem:[%s2017 + $0x14] sm:%s2010]
                %2030 = vst [vmem:[%s2018 + $0x14] sm:%s2010] %v2029
                %v2031 = vld [vmem:[%s2017 + $0x18] sm:%s2010]
                %2032 = vst [vmem:[%s2018 + $0x18] sm:%s2010] %v2031
                %v2033 = vld [vmem:[%s2017 + $0x1c] sm:%s2010]
                %2034 = vst [vmem:[%s2018 + $0x1c] sm:%s2010] %v2033
                %v2035 = vld [vmem:[%s2017 + $0x20] sm:%s2010]
                %2036 = vst [vmem:[%s2018 + $0x20] sm:%s2010] %v2035
                %v2037 = vld [vmem:[%s2017 + $0x24] sm:%s2010]
                %2038 = vst [vmem:[%s2018 + $0x24] sm:%s2010] %v2037
                %v2039 = vld [vmem:[%s2017 + $0x28] sm:%s2010]
                %2040 = vst [vmem:[%s2018 + $0x28] sm:%s2010] %v2039
                %v2041 = vld [vmem:[%s2017 + $0x2c] sm:%s2010]
                %2042 = vst [vmem:[%s2018 + $0x2c] sm:%s2010] %v2041
                %v2043 = vld [vmem:[%s2017 + $0x30] sm:%s2010]
                %2044 = vst [vmem:[%s2018 + $0x30] sm:%s2010] %v2043
                %v2045 = vld [vmem:[%s2017 + $0x34] sm:%s2010]
                %2046 = vst [vmem:[%s2018 + $0x34] sm:%s2010] %v2045
                %v2047 = vld [vmem:[%s2017 + $0x38] sm:%s2010]
                %2048 = vst [vmem:[%s2018 + $0x38] sm:%s2010] %v2047
                %v2049 = vld [vmem:[%s2017 + $0x3c] sm:%s2010]
                %2050 = vst [vmem:[%s2018 + $0x3c] sm:%s2010] %v2049
                %v2051 = vld [vmem:[%s2017 + $0x40] sm:%s2010]
                %2052 = vst [vmem:[%s2018 + $0x100] sm:%s2010] %v2051
                %v2053 = vld [vmem:[%s2017 + $0x44] sm:%s2010]
                %2054 = vst [vmem:[%s2018 + $0x104] sm:%s2010] %v2053
                %v2055 = vld [vmem:[%s2017 + $0x48] sm:%s2010]
                %2056 = vst [vmem:[%s2018 + $0x108] sm:%s2010] %v2055
                %v2057 = vld [vmem:[%s2017 + $0x4c] sm:%s2010]
                %2058 = vst [vmem:[%s2018 + $0x10c] sm:%s2010] %v2057
                %v2059 = vld [vmem:[%s2017 + $0x50] sm:%s2010]
                %2060 = vst [vmem:[%s2018 + $0x110] sm:%s2010] %v2059
                %v2061 = vld [vmem:[%s2017 + $0x54] sm:%s2010]
                %2062 = vst [vmem:[%s2018 + $0x114] sm:%s2010] %v2061
                %v2063 = vld [vmem:[%s2017 + $0x58] sm:%s2010]
                %2064 = vst [vmem:[%s2018 + $0x118] sm:%s2010] %v2063
                %v2065 = vld [vmem:[%s2017 + $0x5c] sm:%s2010]
                %2066 = vst [vmem:[%s2018 + $0x11c] sm:%s2010] %v2065
                %v2067 = vld [vmem:[%s2017 + $0x60] sm:%s2010]
                %2068 = vst [vmem:[%s2018 + $0x120] sm:%s2010] %v2067
                %v2069 = vld [vmem:[%s2017 + $0x64] sm:%s2010]
                %2070 = vst [vmem:[%s2018 + $0x124] sm:%s2010] %v2069
                %v2071 = vld [vmem:[%s2017 + $0x68] sm:%s2010]
                %2072 = vst [vmem:[%s2018 + $0x128] sm:%s2010] %v2071
                %v2073 = vld [vmem:[%s2017 + $0x6c] sm:%s2010]
                %2074 = vst [vmem:[%s2018 + $0x12c] sm:%s2010] %v2073
                %v2075 = vld [vmem:[%s2017 + $0x70] sm:%s2010]
                %2076 = vst [vmem:[%s2018 + $0x130] sm:%s2010] %v2075
                %v2077 = vld [vmem:[%s2017 + $0x74] sm:%s2010]
                %2078 = vst [vmem:[%s2018 + $0x134] sm:%s2010] %v2077
                %v2079 = vld [vmem:[%s2017 + $0x78] sm:%s2010]
                %2080 = vst [vmem:[%s2018 + $0x138] sm:%s2010] %v2079
                %v2081 = vld [vmem:[%s2017 + $0x7c] sm:%s2010]
                %2082 = vst [vmem:[%s2018 + $0x13c] sm:%s2010] %v2081
              $region61: #{tpu_custom_call.1} parent=55 // loop_footer
                %s2016 = sadd.s32 1, %s2012
              $region62: #{tpu_custom_call.1} parent=55 // loop_footer_branch
                %2011 = sbr.rel target = $region58
              $region63: #{tpu_custom_call.1} parent=55 // loop_exit
                _
            $region56: #{tpu_custom_call.1} parent=47 // pred_fallthru
              _
          $region48: #{tpu_custom_call.1} parent=43 // pred_fallthru
            _
          %2167 = vnop
        $region44: #{tpu_custom_call.1} parent=39 // pred_fallthru
          _
      $region40: #{tpu_custom_call.1} parent=5 // pred_fallthru
        _
      %p2168 = scmp.le.s32.totalorder 2, %s11
      // Predicated region
      $region82: #{tpu_custom_call.1} parent=5 // pred_check
        %p2169 = pneg %p2168
      $region83: #{tpu_custom_call.1} parent=5 // pred_check_branch
        %2171 = sbr.rel (%p2169) target = $region85
      $region84: #{tpu_custom_call.1} parent=5 // pred_region
        %s2172 = ssub.s32 %s11, 2
        // Predicated region
        $region86: #{tpu_custom_call.1} parent=84 // pred_check
          %p2173 = pneg %p196
        $region87: #{tpu_custom_call.1} parent=84 // pred_check_branch
          %2175 = sbr.rel (%p2173) target = $region89
        $region88: #{tpu_custom_call.1} parent=84 // pred_region
          %s2176 = sand.u32 %s181, 1
          %s2177 = sand.u32 %s181, 1
          %s2178 = smul.addr %s2177, 128
          %s2179 = scalar_lea.vmem [#allocation2], %s2178
        $region89: #{tpu_custom_call.1} parent=84 // pred_fallthru
          _
      $region85: #{tpu_custom_call.1} parent=5 // pred_fallthru
        _
    $region6: #{tpu_custom_call.1} parent=1 // loop_footer
      %s15 = sadd.s32 1, %s11
    $region7: #{tpu_custom_call.1} parent=1 // loop_footer_branch
      %10 = sbr.rel target = $region3
    $region8: #{tpu_custom_call.1} parent=1 // loop_exit
      _

</llo_original>
